<compile_context>
chip_gen: v5e
topology: v5e:2x2
jax: 0.10.0
libtpu: 0.0.40
codegen_flags: <defaults>
</compile_context>

<pallas_src>
import jax
import jax.numpy as jnp
from jax.experimental import pallas as pl
from jax.experimental.pallas import tpu as pltpu

EPS = 1e-5


# ------------------------------ Pallas kernel --------------------------------
def hidden_kernel(x_ref, su_ref, sd_ref, p_ref,
                  b1_ref, g1_ref, be1_ref,
                  b2_ref, g2_ref, be2_ref,
                  b3_ref, g3_ref, be3_ref,
                  rpool_ref, cpool_ref, out_ref):
    """3x(conv3x3 -> BN(train) -> ReLU) -> global avg pool, lane-dense layout.

      x_ref      : (NH, WC)    activations, row r = n*H+h, col j = w*C+c
      su/sd_ref  : (NH, NH)    row-shift matrices for the dy=-1 / dy=+1 taps
                               (image-boundary zeroing folded in)
      b*_ref     : (3, WC, WC) banded conv-tap matrices (dx taps + channel mix)
      g*/be*_ref : (1, WC)     BN gamma/beta tiled to the (w, c) lane layout
      p_ref      : (WC, WC)    channel pool-and-broadcast, pre-scaled 1/(N*H*W)
      rpool_ref  : (N, NH)     per-image row pooling (entries 1/H)
      cpool_ref  : (WC, C)     per-channel lane pooling (entries 1/W)
      out_ref    : (N, C)
    """
    su = su_ref[...]
    sd = sd_ref[...]
    p = p_ref[...]

    def conv_bn_relu(x, b_ref, gamma, beta):
        # ---- 3x3 conv as 3 lane-dense MXU matmuls (one per dy tap) --------
        x_up = jnp.dot(su, x, preferred_element_type=jnp.float32)   # row h-1
        x_dn = jnp.dot(sd, x, preferred_element_type=jnp.float32)   # row h+1
        acc = jnp.dot(x_up, b_ref[0], preferred_element_type=jnp.float32)
        acc += jnp.dot(x, b_ref[1], preferred_element_type=jnp.float32)
        acc += jnp.dot(x_dn, b_ref[2], preferred_element_type=jnp.float32)
        # ---- BatchNorm (training mode, biased var), fused one-pass stats --
        s1 = jnp.sum(acc, axis=0, keepdims=True)           # (1, WC)
        s2 = jnp.sum(acc * acc, axis=0, keepdims=True)      # (1, WC)
        mean = jnp.dot(s1, p, preferred_element_type=jnp.float32)    # E[x]
        meansq = jnp.dot(s2, p, preferred_element_type=jnp.float32)  # E[x^2]
        var = meansq - mean * mean
        y = (acc - mean) * jax.lax.rsqrt(var + EPS) * gamma + beta
        return jnp.maximum(y, 0.0)

    out = conv_bn_relu(x_ref[...], b1_ref, g1_ref[...], be1_ref[...])
    out = conv_bn_relu(out, b2_ref, g2_ref[...], be2_ref[...])
    out = conv_bn_relu(out, b3_ref, g3_ref[...], be3_ref[...])

    # AdaptiveAvgPool2d(1) + view(-1, C): mean over (h, w) per (n, c).
    per_img = jnp.dot(rpool_ref[...], out, preferred_element_type=jnp.float32)
    out_ref[...] = jnp.dot(per_img, cpool_ref[...],
                           preferred_element_type=jnp.float32)


# --------------------------- host-side operand prep --------------------------
def _band_matrices(w_hwio, width, chans):
    """(3, 3, Cin, Cout) HWIO conv weight -> (3, W*C, W*C) banded tap matrices.

    band[dy, w_in*C + ci, w_out*C + co] = w_hwio[dy, w_in - w_out + 1, ci, co]
    when |w_in - w_out| <= 1, else 0.  Zero-padding along W is implicit.
    """
    wc = width * chans
    idx = jnp.arange(wc)
    w_in = idx // chans
    ci = idx % chans
    w_out = idx // chans
    co = idx % chans
    dx = w_in[:, None] - w_out[None, :] + 1                    # (WC, WC)
    valid = (dx >= 0) & (dx <= 2)
    dx_c = jnp.clip(dx, 0, 2)
    band = w_hwio[:, dx_c, ci[:, None], co[None, :]]           # (3, WC, WC)
    return band * valid[None, :, :].astype(w_hwio.dtype)


def _shift_matrices(batch, height):
    """Row-shift matrices with per-image boundary zeroing folded in."""
    nh = batch * height
    r = jnp.arange(nh)
    # x_up = S_up @ x : x_up[r] = x[r-1] unless r is the first row of an image.
    s_up = (r[:, None] - 1 == r[None, :]) & (r[:, None] % height != 0)
    # x_dn = S_dn @ x : x_dn[r] = x[r+1] unless r is the last row of an image.
    s_dn = (r[:, None] + 1 == r[None, :]) & (r[:, None] % height != height - 1)
    return s_up.astype(jnp.float32), s_dn.astype(jnp.float32)


def hidden_forward(x_nchw, conv_weights_oihw, bn_gammas, bn_betas):
    """x_nchw: (N, C, H, W); conv weights in PyTorch OIHW; gamma/beta (C,)."""
    n, c, h, w = x_nchw.shape
    nh, wc = n * h, w * c

    # NCHW -> NHWC -> lane-dense (N*H, W*C) slab (pure row-major reshape).
    x2d = jnp.transpose(x_nchw, (0, 2, 3, 1)).astype(jnp.float32).reshape(nh, wc)

    s_up, s_dn = _shift_matrices(n, h)

    idx = jnp.arange(wc)
    # Channel pool-and-broadcast, pre-scaled by 1/(N*H*W) so s @ p == E[.].
    p = (idx[:, None] % c == idx[None, :] % c).astype(jnp.float32) / (n * h * w)
    # Global-average-pool factors.
    rpool = (jnp.arange(n)[:, None] == (jnp.arange(nh) // h)[None, :]
             ).astype(jnp.float32) / h                          # (N, NH)
    cpool = (idx[:, None] % c == jnp.arange(c)[None, :]
             ).astype(jnp.float32) / w                          # (WC, C)

    bands, gammas_t, betas_t = [], [], []
    for w_oihw, g, b in zip(conv_weights_oihw, bn_gammas, bn_betas):
        w_hwio = jnp.transpose(w_oihw, (2, 3, 1, 0)).astype(jnp.float32)
        bands.append(_band_matrices(w_hwio, w, c))
        gammas_t.append(jnp.tile(g.astype(jnp.float32), w).reshape(1, wc))
        betas_t.append(jnp.tile(b.astype(jnp.float32), w).reshape(1, wc))

    vmem = pl.BlockSpec(memory_space=pltpu.MemorySpace.VMEM)
    return pl.pallas_call(
        hidden_kernel,
        out_shape=jax.ShapeDtypeStruct((n, c), jnp.float32),
        in_specs=[vmem] * 15,
        out_specs=vmem,
    )(x2d, s_up, s_dn, p,
      bands[0], gammas_t[0], betas_t[0],
      bands[1], gammas_t[1], betas_t[1],
      bands[2], gammas_t[2], betas_t[2],
      rpool, cpool)


# ----------------------- pure-JAX reference (for checking) -------------------
def ref_forward(x_nchw, params_oihw):
    (w1, g1, b1), (w2, g2, b2), (w3, g3, b3) = params_oihw

    def conv(x, w):
        return jax.lax.conv_general_dilated(
            x, w, window_strides=(1, 1), padding=((1, 1), (1, 1)),
            dimension_numbers=('NCHW', 'OIHW', 'NCHW'))

    def bn_relu(x, g, b):
        mean = jnp.mean(x, axis=(0, 2, 3), keepdims=True)
        var = jnp.mean(jnp.square(x - mean), axis=(0, 2, 3), keepdims=True)
        y = (x - mean) * jax.lax.rsqrt(var + EPS) * g.reshape(1, -1, 1, 1) \
            + b.reshape(1, -1, 1, 1)
        return jnp.maximum(y, 0.0)

    out = bn_relu(conv(x_nchw, w1), g1, b1)
    out = bn_relu(conv(out, w2), g2, b2)
    out = bn_relu(conv(out, w3), g3, b3)
    return jnp.mean(out, axis=(2, 3))                           # (N, C)


if __name__ == "__main__":
    # Small synthetic shapes (inplanes == planes == C); W*C == 128 lanes.
    N, C, H, W = 2, 8, 16, 16
    key = jax.random.PRNGKey(0)
    keys = jax.random.split(key, 10)

    def conv_w(k):  # PyTorch OIHW
        return 0.1 * jax.random.normal(k, (C, C, 3, 3), jnp.float32)

    def bn_params(kg, kb):
        gamma = 1.0 + 0.1 * jax.random.normal(kg, (C,), jnp.float32)
        beta = 0.1 * jax.random.normal(kb, (C,), jnp.float32)
        return gamma, beta

    w1 = conv_w(keys[0]); g1, b1 = bn_params(keys[1], keys[2])
    w2 = conv_w(keys[3]); g2, b2 = bn_params(keys[4], keys[5])
    w3 = conv_w(keys[6]); g3, b3 = bn_params(keys[7], keys[8])

    x = jax.random.normal(keys[9], (N, C, H, W), jnp.float32)   # NCHW like PyTorch

    out = jax.block_until_ready(
        hidden_forward(x, (w1, w2, w3), (g1, g2, g3), (b1, b2, b3)))
    assert out.shape == (N, C)

    ref = ref_forward(x, ((w1, g1, b1), (w2, g2, b2), (w3, g3, b3)))
    assert jnp.allclose(out, ref, atol=2e-3, rtol=2e-3), "mismatch vs JAX reference"

    print("KERNEL_OK")
</pallas_src>

<mosaic_0001>
module attributes {stable_mosaic.version = 11 : i64} {
  func.func @hidden_kernel(%arg0: memref<32x128xf32, #tpu.memory_space<vmem>>, %arg1: memref<32x32xf32, #tpu.memory_space<vmem>>, %arg2: memref<32x32xf32, #tpu.memory_space<vmem>>, %arg3: memref<128x128xf32, #tpu.memory_space<vmem>>, %arg4: memref<3x128x128xf32, #tpu.memory_space<vmem>>, %arg5: memref<1x128xf32, #tpu.memory_space<vmem>>, %arg6: memref<1x128xf32, #tpu.memory_space<vmem>>, %arg7: memref<3x128x128xf32, #tpu.memory_space<vmem>>, %arg8: memref<1x128xf32, #tpu.memory_space<vmem>>, %arg9: memref<1x128xf32, #tpu.memory_space<vmem>>, %arg10: memref<3x128x128xf32, #tpu.memory_space<vmem>>, %arg11: memref<1x128xf32, #tpu.memory_space<vmem>>, %arg12: memref<1x128xf32, #tpu.memory_space<vmem>>, %arg13: memref<2x32xf32, #tpu.memory_space<vmem>>, %arg14: memref<128x8xf32, #tpu.memory_space<vmem>>, %arg15: memref<2x8xf32, #tpu.memory_space<vmem>>) attributes {dimension_semantics = [], scalar_prefetch = 0 : i64, scratch_operands = 0 : i64, tpu.core_type = #tpu.core_type<tc>} {
    %c0 = arith.constant 0 : index
    %c0_0 = arith.constant 0 : index
    %0 = vector.load %arg1[%c0, %c0_0] : memref<32x32xf32, #tpu.memory_space<vmem>>, vector<32x32xf32>
    %c0_1 = arith.constant 0 : index
    %c0_2 = arith.constant 0 : index
    %1 = vector.load %arg2[%c0_1, %c0_2] : memref<32x32xf32, #tpu.memory_space<vmem>>, vector<32x32xf32>
    %c0_3 = arith.constant 0 : index
    %c0_4 = arith.constant 0 : index
    %2 = vector.load %arg3[%c0_3, %c0_4] : memref<128x128xf32, #tpu.memory_space<vmem>>, vector<128x128xf32>
    %c0_5 = arith.constant 0 : index
    %c0_6 = arith.constant 0 : index
    %3 = vector.load %arg0[%c0_5, %c0_6] : memref<32x128xf32, #tpu.memory_space<vmem>>, vector<32x128xf32>
    %c0_7 = arith.constant 0 : index
    %c0_8 = arith.constant 0 : index
    %4 = vector.load %arg5[%c0_7, %c0_8] : memref<1x128xf32, #tpu.memory_space<vmem>>, vector<1x128xf32>
    %c0_9 = arith.constant 0 : index
    %c0_10 = arith.constant 0 : index
    %5 = vector.load %arg6[%c0_9, %c0_10] : memref<1x128xf32, #tpu.memory_space<vmem>>, vector<1x128xf32>
    %cst = arith.constant dense<0.000000e+00> : vector<32x128xf32>
    %6 = tpu.matmul %0, %3, %cst {dimension_numbers = #tpu.dot_dimension_numbers<[1], [0], [0], [1], [0, 0, 1, 1], [], []>} : vector<32x32xf32>, vector<32x128xf32>, vector<32x128xf32> -> vector<32x128xf32>
    %cst_11 = arith.constant dense<0.000000e+00> : vector<32x128xf32>
    %7 = tpu.matmul %1, %3, %cst_11 {dimension_numbers = #tpu.dot_dimension_numbers<[1], [0], [0], [1], [0, 0, 1, 1], [], []>} : vector<32x32xf32>, vector<32x128xf32>, vector<32x128xf32> -> vector<32x128xf32>
    %c0_12 = arith.constant 0 : index
    %c0_13 = arith.constant 0 : index
    %c0_14 = arith.constant 0 : index
    %8 = vector.load %arg4[%c0_12, %c0_13, %c0_14] : memref<3x128x128xf32, #tpu.memory_space<vmem>>, vector<1x128x128xf32>
    %9 = vector.shape_cast %8 : vector<1x128x128xf32> to vector<128x128xf32>
    %cst_15 = arith.constant dense<0.000000e+00> : vector<32x128xf32>
    %10 = tpu.matmul %6, %9, %cst_15 {dimension_numbers = #tpu.dot_dimension_numbers<[1], [0], [0], [1], [0, 0, 1, 1], [], []>} : vector<32x128xf32>, vector<128x128xf32>, vector<32x128xf32> -> vector<32x128xf32>
    %c1 = arith.constant 1 : index
    %c0_16 = arith.constant 0 : index
    %c0_17 = arith.constant 0 : index
    %11 = vector.load %arg4[%c1, %c0_16, %c0_17] : memref<3x128x128xf32, #tpu.memory_space<vmem>>, vector<1x128x128xf32>
    %12 = vector.shape_cast %11 : vector<1x128x128xf32> to vector<128x128xf32>
    %cst_18 = arith.constant dense<0.000000e+00> : vector<32x128xf32>
    %13 = tpu.matmul %3, %12, %cst_18 {dimension_numbers = #tpu.dot_dimension_numbers<[1], [0], [0], [1], [0, 0, 1, 1], [], []>} : vector<32x128xf32>, vector<128x128xf32>, vector<32x128xf32> -> vector<32x128xf32>
    %14 = arith.addf %10, %13 : vector<32x128xf32>
    %c2 = arith.constant 2 : index
    %c0_19 = arith.constant 0 : index
    %c0_20 = arith.constant 0 : index
    %15 = vector.load %arg4[%c2, %c0_19, %c0_20] : memref<3x128x128xf32, #tpu.memory_space<vmem>>, vector<1x128x128xf32>
    %16 = vector.shape_cast %15 : vector<1x128x128xf32> to vector<128x128xf32>
    %cst_21 = arith.constant dense<0.000000e+00> : vector<32x128xf32>
    %17 = tpu.matmul %7, %16, %cst_21 {dimension_numbers = #tpu.dot_dimension_numbers<[1], [0], [0], [1], [0, 0, 1, 1], [], []>} : vector<32x128xf32>, vector<128x128xf32>, vector<32x128xf32> -> vector<32x128xf32>
    %18 = arith.addf %14, %17 : vector<32x128xf32>
    %cst_22 = arith.constant dense<0.000000e+00> : vector<128xf32>
    %19 = vector.multi_reduction <add>, %18, %cst_22 [0] : vector<32x128xf32> to vector<128xf32>
    %20 = vector.shape_cast %19 : vector<128xf32> to vector<1x128xf32>
    %21 = arith.mulf %18, %18 : vector<32x128xf32>
    %cst_23 = arith.constant dense<0.000000e+00> : vector<128xf32>
    %22 = vector.multi_reduction <add>, %21, %cst_23 [0] : vector<32x128xf32> to vector<128xf32>
    %23 = vector.shape_cast %22 : vector<128xf32> to vector<1x128xf32>
    %cst_24 = arith.constant dense<0.000000e+00> : vector<1x128xf32>
    %24 = tpu.matmul %20, %2, %cst_24 {dimension_numbers = #tpu.dot_dimension_numbers<[1], [0], [0], [1], [0, 0, 1, 1], [], []>} : vector<1x128xf32>, vector<128x128xf32>, vector<1x128xf32> -> vector<1x128xf32>
    %cst_25 = arith.constant dense<0.000000e+00> : vector<1x128xf32>
    %25 = tpu.matmul %23, %2, %cst_25 {dimension_numbers = #tpu.dot_dimension_numbers<[1], [0], [0], [1], [0, 0, 1, 1], [], []>} : vector<1x128xf32>, vector<128x128xf32>, vector<1x128xf32> -> vector<1x128xf32>
    %26 = arith.mulf %24, %24 : vector<1x128xf32>
    %27 = arith.subf %25, %26 : vector<1x128xf32>
    %28 = vector.broadcast %24 : vector<1x128xf32> to vector<32x128xf32>
    %29 = arith.subf %18, %28 : vector<32x128xf32>
    %cst_26 = arith.constant 9.99999974E-6 : f32
    %30 = vector.broadcast %cst_26 : f32 to vector<1x128xf32>
    %31 = arith.addf %27, %30 : vector<1x128xf32>
    %32 = math.rsqrt %31 : vector<1x128xf32>
    %33 = vector.broadcast %32 : vector<1x128xf32> to vector<32x128xf32>
    %34 = arith.mulf %29, %33 : vector<32x128xf32>
    %35 = vector.broadcast %4 : vector<1x128xf32> to vector<32x128xf32>
    %36 = arith.mulf %34, %35 : vector<32x128xf32>
    %37 = vector.broadcast %5 : vector<1x128xf32> to vector<32x128xf32>
    %38 = arith.addf %36, %37 : vector<32x128xf32>
    %cst_27 = arith.constant 0.000000e+00 : f32
    %39 = vector.broadcast %cst_27 : f32 to vector<32x128xf32>
    %40 = arith.maximumf %38, %39 : vector<32x128xf32>
    %c0_28 = arith.constant 0 : index
    %c0_29 = arith.constant 0 : index
    %41 = vector.load %arg8[%c0_28, %c0_29] : memref<1x128xf32, #tpu.memory_space<vmem>>, vector<1x128xf32>
    %c0_30 = arith.constant 0 : index
    %c0_31 = arith.constant 0 : index
    %42 = vector.load %arg9[%c0_30, %c0_31] : memref<1x128xf32, #tpu.memory_space<vmem>>, vector<1x128xf32>
    %cst_32 = arith.constant dense<0.000000e+00> : vector<32x128xf32>
    %43 = tpu.matmul %0, %40, %cst_32 {dimension_numbers = #tpu.dot_dimension_numbers<[1], [0], [0], [1], [0, 0, 1, 1], [], []>} : vector<32x32xf32>, vector<32x128xf32>, vector<32x128xf32> -> vector<32x128xf32>
    %cst_33 = arith.constant dense<0.000000e+00> : vector<32x128xf32>
    %44 = tpu.matmul %1, %40, %cst_33 {dimension_numbers = #tpu.dot_dimension_numbers<[1], [0], [0], [1], [0, 0, 1, 1], [], []>} : vector<32x32xf32>, vector<32x128xf32>, vector<32x128xf32> -> vector<32x128xf32>
    %c0_34 = arith.constant 0 : index
    %c0_35 = arith.constant 0 : index
    %c0_36 = arith.constant 0 : index
    %45 = vector.load %arg7[%c0_34, %c0_35, %c0_36] : memref<3x128x128xf32, #tpu.memory_space<vmem>>, vector<1x128x128xf32>
    %46 = vector.shape_cast %45 : vector<1x128x128xf32> to vector<128x128xf32>
    %cst_37 = arith.constant dense<0.000000e+00> : vector<32x128xf32>
    %47 = tpu.matmul %43, %46, %cst_37 {dimension_numbers = #tpu.dot_dimension_numbers<[1], [0], [0], [1], [0, 0, 1, 1], [], []>} : vector<32x128xf32>, vector<128x128xf32>, vector<32x128xf32> -> vector<32x128xf32>
    %c1_38 = arith.constant 1 : index
    %c0_39 = arith.constant 0 : index
    %c0_40 = arith.constant 0 : index
    %48 = vector.load %arg7[%c1_38, %c0_39, %c0_40] : memref<3x128x128xf32, #tpu.memory_space<vmem>>, vector<1x128x128xf32>
    %49 = vector.shape_cast %48 : vector<1x128x128xf32> to vector<128x128xf32>
    %cst_41 = arith.constant dense<0.000000e+00> : vector<32x128xf32>
    %50 = tpu.matmul %40, %49, %cst_41 {dimension_numbers = #tpu.dot_dimension_numbers<[1], [0], [0], [1], [0, 0, 1, 1], [], []>} : vector<32x128xf32>, vector<128x128xf32>, vector<32x128xf32> -> vector<32x128xf32>
    %51 = arith.addf %47, %50 : vector<32x128xf32>
    %c2_42 = arith.constant 2 : index
    %c0_43 = arith.constant 0 : index
    %c0_44 = arith.constant 0 : index
    %52 = vector.load %arg7[%c2_42, %c0_43, %c0_44] : memref<3x128x128xf32, #tpu.memory_space<vmem>>, vector<1x128x128xf32>
    %53 = vector.shape_cast %52 : vector<1x128x128xf32> to vector<128x128xf32>
    %cst_45 = arith.constant dense<0.000000e+00> : vector<32x128xf32>
    %54 = tpu.matmul %44, %53, %cst_45 {dimension_numbers = #tpu.dot_dimension_numbers<[1], [0], [0], [1], [0, 0, 1, 1], [], []>} : vector<32x128xf32>, vector<128x128xf32>, vector<32x128xf32> -> vector<32x128xf32>
    %55 = arith.addf %51, %54 : vector<32x128xf32>
    %cst_46 = arith.constant dense<0.000000e+00> : vector<128xf32>
    %56 = vector.multi_reduction <add>, %55, %cst_46 [0] : vector<32x128xf32> to vector<128xf32>
    %57 = vector.shape_cast %56 : vector<128xf32> to vector<1x128xf32>
    %58 = arith.mulf %55, %55 : vector<32x128xf32>
    %cst_47 = arith.constant dense<0.000000e+00> : vector<128xf32>
    %59 = vector.multi_reduction <add>, %58, %cst_47 [0] : vector<32x128xf32> to vector<128xf32>
    %60 = vector.shape_cast %59 : vector<128xf32> to vector<1x128xf32>
    %cst_48 = arith.constant dense<0.000000e+00> : vector<1x128xf32>
    %61 = tpu.matmul %57, %2, %cst_48 {dimension_numbers = #tpu.dot_dimension_numbers<[1], [0], [0], [1], [0, 0, 1, 1], [], []>} : vector<1x128xf32>, vector<128x128xf32>, vector<1x128xf32> -> vector<1x128xf32>
    %cst_49 = arith.constant dense<0.000000e+00> : vector<1x128xf32>
    %62 = tpu.matmul %60, %2, %cst_49 {dimension_numbers = #tpu.dot_dimension_numbers<[1], [0], [0], [1], [0, 0, 1, 1], [], []>} : vector<1x128xf32>, vector<128x128xf32>, vector<1x128xf32> -> vector<1x128xf32>
    %63 = arith.mulf %61, %61 : vector<1x128xf32>
    %64 = arith.subf %62, %63 : vector<1x128xf32>
    %65 = vector.broadcast %61 : vector<1x128xf32> to vector<32x128xf32>
    %66 = arith.subf %55, %65 : vector<32x128xf32>
    %cst_50 = arith.constant 9.99999974E-6 : f32
    %67 = vector.broadcast %cst_50 : f32 to vector<1x128xf32>
    %68 = arith.addf %64, %67 : vector<1x128xf32>
    %69 = math.rsqrt %68 : vector<1x128xf32>
    %70 = vector.broadcast %69 : vector<1x128xf32> to vector<32x128xf32>
    %71 = arith.mulf %66, %70 : vector<32x128xf32>
    %72 = vector.broadcast %41 : vector<1x128xf32> to vector<32x128xf32>
    %73 = arith.mulf %71, %72 : vector<32x128xf32>
    %74 = vector.broadcast %42 : vector<1x128xf32> to vector<32x128xf32>
    %75 = arith.addf %73, %74 : vector<32x128xf32>
    %cst_51 = arith.constant 0.000000e+00 : f32
    %76 = vector.broadcast %cst_51 : f32 to vector<32x128xf32>
    %77 = arith.maximumf %75, %76 : vector<32x128xf32>
    %c0_52 = arith.constant 0 : index
    %c0_53 = arith.constant 0 : index
    %78 = vector.load %arg11[%c0_52, %c0_53] : memref<1x128xf32, #tpu.memory_space<vmem>>, vector<1x128xf32>
    %c0_54 = arith.constant 0 : index
    %c0_55 = arith.constant 0 : index
    %79 = vector.load %arg12[%c0_54, %c0_55] : memref<1x128xf32, #tpu.memory_space<vmem>>, vector<1x128xf32>
    %cst_56 = arith.constant dense<0.000000e+00> : vector<32x128xf32>
    %80 = tpu.matmul %0, %77, %cst_56 {dimension_numbers = #tpu.dot_dimension_numbers<[1], [0], [0], [1], [0, 0, 1, 1], [], []>} : vector<32x32xf32>, vector<32x128xf32>, vector<32x128xf32> -> vector<32x128xf32>
    %cst_57 = arith.constant dense<0.000000e+00> : vector<32x128xf32>
    %81 = tpu.matmul %1, %77, %cst_57 {dimension_numbers = #tpu.dot_dimension_numbers<[1], [0], [0], [1], [0, 0, 1, 1], [], []>} : vector<32x32xf32>, vector<32x128xf32>, vector<32x128xf32> -> vector<32x128xf32>
    %c0_58 = arith.constant 0 : index
    %c0_59 = arith.constant 0 : index
    %c0_60 = arith.constant 0 : index
    %82 = vector.load %arg10[%c0_58, %c0_59, %c0_60] : memref<3x128x128xf32, #tpu.memory_space<vmem>>, vector<1x128x128xf32>
    %83 = vector.shape_cast %82 : vector<1x128x128xf32> to vector<128x128xf32>
    %cst_61 = arith.constant dense<0.000000e+00> : vector<32x128xf32>
    %84 = tpu.matmul %80, %83, %cst_61 {dimension_numbers = #tpu.dot_dimension_numbers<[1], [0], [0], [1], [0, 0, 1, 1], [], []>} : vector<32x128xf32>, vector<128x128xf32>, vector<32x128xf32> -> vector<32x128xf32>
    %c1_62 = arith.constant 1 : index
    %c0_63 = arith.constant 0 : index
    %c0_64 = arith.constant 0 : index
    %85 = vector.load %arg10[%c1_62, %c0_63, %c0_64] : memref<3x128x128xf32, #tpu.memory_space<vmem>>, vector<1x128x128xf32>
    %86 = vector.shape_cast %85 : vector<1x128x128xf32> to vector<128x128xf32>
    %cst_65 = arith.constant dense<0.000000e+00> : vector<32x128xf32>
    %87 = tpu.matmul %77, %86, %cst_65 {dimension_numbers = #tpu.dot_dimension_numbers<[1], [0], [0], [1], [0, 0, 1, 1], [], []>} : vector<32x128xf32>, vector<128x128xf32>, vector<32x128xf32> -> vector<32x128xf32>
    %88 = arith.addf %84, %87 : vector<32x128xf32>
    %c2_66 = arith.constant 2 : index
    %c0_67 = arith.constant 0 : index
    %c0_68 = arith.constant 0 : index
    %89 = vector.load %arg10[%c2_66, %c0_67, %c0_68] : memref<3x128x128xf32, #tpu.memory_space<vmem>>, vector<1x128x128xf32>
    %90 = vector.shape_cast %89 : vector<1x128x128xf32> to vector<128x128xf32>
    %cst_69 = arith.constant dense<0.000000e+00> : vector<32x128xf32>
    %91 = tpu.matmul %81, %90, %cst_69 {dimension_numbers = #tpu.dot_dimension_numbers<[1], [0], [0], [1], [0, 0, 1, 1], [], []>} : vector<32x128xf32>, vector<128x128xf32>, vector<32x128xf32> -> vector<32x128xf32>
    %92 = arith.addf %88, %91 : vector<32x128xf32>
    %cst_70 = arith.constant dense<0.000000e+00> : vector<128xf32>
    %93 = vector.multi_reduction <add>, %92, %cst_70 [0] : vector<32x128xf32> to vector<128xf32>
    %94 = vector.shape_cast %93 : vector<128xf32> to vector<1x128xf32>
    %95 = arith.mulf %92, %92 : vector<32x128xf32>
    %cst_71 = arith.constant dense<0.000000e+00> : vector<128xf32>
    %96 = vector.multi_reduction <add>, %95, %cst_71 [0] : vector<32x128xf32> to vector<128xf32>
    %97 = vector.shape_cast %96 : vector<128xf32> to vector<1x128xf32>
    %cst_72 = arith.constant dense<0.000000e+00> : vector<1x128xf32>
    %98 = tpu.matmul %94, %2, %cst_72 {dimension_numbers = #tpu.dot_dimension_numbers<[1], [0], [0], [1], [0, 0, 1, 1], [], []>} : vector<1x128xf32>, vector<128x128xf32>, vector<1x128xf32> -> vector<1x128xf32>
    %cst_73 = arith.constant dense<0.000000e+00> : vector<1x128xf32>
    %99 = tpu.matmul %97, %2, %cst_73 {dimension_numbers = #tpu.dot_dimension_numbers<[1], [0], [0], [1], [0, 0, 1, 1], [], []>} : vector<1x128xf32>, vector<128x128xf32>, vector<1x128xf32> -> vector<1x128xf32>
    %100 = arith.mulf %98, %98 : vector<1x128xf32>
    %101 = arith.subf %99, %100 : vector<1x128xf32>
    %102 = vector.broadcast %98 : vector<1x128xf32> to vector<32x128xf32>
    %103 = arith.subf %92, %102 : vector<32x128xf32>
    %cst_74 = arith.constant 9.99999974E-6 : f32
    %104 = vector.broadcast %cst_74 : f32 to vector<1x128xf32>
    %105 = arith.addf %101, %104 : vector<1x128xf32>
    %106 = math.rsqrt %105 : vector<1x128xf32>
    %107 = vector.broadcast %106 : vector<1x128xf32> to vector<32x128xf32>
    %108 = arith.mulf %103, %107 : vector<32x128xf32>
    %109 = vector.broadcast %78 : vector<1x128xf32> to vector<32x128xf32>
    %110 = arith.mulf %108, %109 : vector<32x128xf32>
    %111 = vector.broadcast %79 : vector<1x128xf32> to vector<32x128xf32>
    %112 = arith.addf %110, %111 : vector<32x128xf32>
    %cst_75 = arith.constant 0.000000e+00 : f32
    %113 = vector.broadcast %cst_75 : f32 to vector<32x128xf32>
    %114 = arith.maximumf %112, %113 : vector<32x128xf32>
    %c0_76 = arith.constant 0 : index
    %c0_77 = arith.constant 0 : index
    %115 = vector.load %arg13[%c0_76, %c0_77] : memref<2x32xf32, #tpu.memory_space<vmem>>, vector<2x32xf32>
    %cst_78 = arith.constant dense<0.000000e+00> : vector<2x128xf32>
    %116 = tpu.matmul %115, %114, %cst_78 {dimension_numbers = #tpu.dot_dimension_numbers<[1], [0], [0], [1], [0, 0, 1, 1], [], []>} : vector<2x32xf32>, vector<32x128xf32>, vector<2x128xf32> -> vector<2x128xf32>
    %c0_79 = arith.constant 0 : index
    %c0_80 = arith.constant 0 : index
    %117 = vector.load %arg14[%c0_79, %c0_80] : memref<128x8xf32, #tpu.memory_space<vmem>>, vector<128x8xf32>
    %cst_81 = arith.constant dense<0.000000e+00> : vector<2x8xf32>
    %118 = tpu.matmul %116, %117, %cst_81 {dimension_numbers = #tpu.dot_dimension_numbers<[1], [0], [0], [1], [0, 0, 1, 1], [], []>} : vector<2x128xf32>, vector<128x8xf32>, vector<2x8xf32> -> vector<2x8xf32>
    %c0_82 = arith.constant 0 : index
    %c0_83 = arith.constant 0 : index
    %119 = vector.load %arg15[%c0_82, %c0_83] : memref<2x8xf32, #tpu.memory_space<vmem>>, vector<2x8xf32>
    tpu.vector_store %arg15[%c0_82, %c0_83], %118 {strides = array<i32>} : memref<2x8xf32, #tpu.memory_space<vmem>>, vector<2x8xf32>,
    return
  }
}

</mosaic_0001>

<llo_original>
// kernel: tpu_custom_call.1
$region0: #{tpu_custom_call.1}
  #allocation0 [shape = 'u32[]', space=smem, size = 0x4, offset = 0x4, fixed_abs, tag = 'smem constant byte address 0x4 - core index']
  #allocation1 [shape = 'u32[72,128]{1,0:T(1,128)}', space=vmem, size = 0x9000, scoped, tag = 'internal scratch']
  %s0 = inlined_call_operand.hbm [shape: f32[32,128], index: 0, kind: input, shape index: {}]
  %s1 = inlined_call_operand.hbm [shape: f32[32,32], index: 1, kind: input, shape index: {}]
  %s2 = inlined_call_operand.hbm [shape: f32[32,32], index: 2, kind: input, shape index: {}]
  %s3 = inlined_call_operand.vmem [shape: f32[128,128], index: 3, kind: input, shape index: {}]
  %s4 = inlined_call_operand.hbm [shape: f32[3,128,128], index: 4, kind: input, shape index: {}]
  %s5 = inlined_call_operand.vmem [shape: f32[1,128], index: 5, kind: input, shape index: {}]
  %s6 = inlined_call_operand.vmem [shape: f32[1,128], index: 6, kind: input, shape index: {}]
  %s7 = inlined_call_operand.hbm [shape: f32[3,128,128], index: 7, kind: input, shape index: {}]
  %s8 = inlined_call_operand.vmem [shape: f32[1,128], index: 8, kind: input, shape index: {}]
  %s9 = inlined_call_operand.vmem [shape: f32[1,128], index: 9, kind: input, shape index: {}]
  %s10 = inlined_call_operand.hbm [shape: f32[3,128,128], index: 10, kind: input, shape index: {}]
  %s11 = inlined_call_operand.vmem [shape: f32[1,128], index: 11, kind: input, shape index: {}]
  %s12 = inlined_call_operand.vmem [shape: f32[1,128], index: 12, kind: input, shape index: {}]
  %s13 = inlined_call_operand.vmem [shape: f32[2,32], index: 13, kind: input, shape index: {}]
  %s14 = inlined_call_operand.vmem [shape: f32[128,8], index: 14, kind: input, shape index: {}]
  %s15 = inlined_call_operand.hbm [shape: f32[2,8], index: 15, kind: output, shape index: {}]
  %s16 = sld [smem:[#allocation0]]
  $region94: #{tpu_custom_call.1} parent=0
    _
  %s18 = ssub.s32 1, %s16
  %s19 = scalar_select 0, %s18, %s16
  $region1: #{tpu_custom_call.1} parent=0
    #allocation2 [shape = 'u8[16384]{0}', space=vmem, size = 0x4000, scoped, tag = 'input window, operand 0, single buffered']
    #allocation3 [shape = 's32[1]{0}', space=sflag, size = 0x4, scoped, tag = 'scoped memory for tpu_custom_call.1']
    #allocation4 [shape = 's32[1]{0}', space=sflag, size = 0x4, scoped, tag = 'scoped memory for tpu_custom_call.1']
    #allocation5 [shape = 'u8[16384]{0}', space=vmem, size = 0x4000, scoped, tag = 'input window, operand 1, single buffered']
    #allocation6 [shape = 's32[1]{0}', space=sflag, size = 0x4, scoped, tag = 'scoped memory for tpu_custom_call.1']
    #allocation7 [shape = 'u8[16384]{0}', space=vmem, size = 0x4000, scoped, tag = 'input window, operand 2, single buffered']
    #allocation8 [shape = 'u8[196608]{0}', space=vmem, size = 0x30000, scoped, tag = 'input window, operand 4, single buffered']
    #allocation9 [shape = 's32[1]{0}', space=sflag, size = 0x4, scoped, tag = 'scoped memory for tpu_custom_call.1']
    #allocation10 [shape = 'u8[196608]{0}', space=vmem, size = 0x30000, scoped, tag = 'input window, operand 7, single buffered']
    #allocation11 [shape = 'u8[196608]{0}', space=vmem, size = 0x30000, scoped, tag = 'input window, operand 10, single buffered']
    #allocation12 [shape = 's32[1]{0}', space=sflag, size = 0x4, scoped, tag = 'scoped memory for tpu_custom_call.1']
    #allocation13 [shape = 'u8[1024]{0}', space=vmem, size = 0x400, scoped, tag = 'output window, operand 0, single buffered']
    %20 = vsyncpa [#allocation3], 0
    %21 = vsyncpa [#allocation6], 0
    %22 = vsyncpa [#allocation9], 0
    %23 = vsyncpa [#allocation12], 0
    %24 = vsyncpa [#allocation4], 0
    // Predicated region
    $region2: #{tpu_custom_call.1} parent=1 // pred_check
      _
    $region3: #{tpu_custom_call.1} parent=1 // pred_check_branch
      %26 = sbr.rel (0) target = $region5
    $region4: #{tpu_custom_call.1} parent=1 // pred_region
      %28 = vsyncadd [#allocation3], 0
      %s29 = sshll.u32 %s0, 4
      %s30 = int_to_ptr.hbm [resolvable:$true] %s29
      %s31 = sshll.u32 [#allocation2], 4
      %s32 = int_to_ptr.vmem [resolvable:$true] %s31
      %37 = dma.hbm_to_vmem [thread:$0]  %s30, 512, %s32, [#allocation3], 128, 128, 8
    $region5: #{tpu_custom_call.1} parent=1 // pred_fallthru
      _
    // Predicated region
    $region6: #{tpu_custom_call.1} parent=1 // pred_check
      _
    $region7: #{tpu_custom_call.1} parent=1 // pred_check_branch
      %39 = sbr.rel (0) target = $region9
    $region8: #{tpu_custom_call.1} parent=1 // pred_region
      %41 = vsyncadd [#allocation6], 0
      %s42 = sshll.u32 %s1, 4
      %s43 = int_to_ptr.hbm [resolvable:$true] %s42
      %s44 = sshll.u32 [#allocation5], 4
      %s45 = int_to_ptr.vmem [resolvable:$true] %s44
      %50 = dma.hbm_to_vmem [thread:$0]  %s43, 512, %s45, [#allocation6], 128, 128, 8
    $region9: #{tpu_custom_call.1} parent=1 // pred_fallthru
      _
    // Predicated region
    $region10: #{tpu_custom_call.1} parent=1 // pred_check
      _
    $region11: #{tpu_custom_call.1} parent=1 // pred_check_branch
      %52 = sbr.rel (0) target = $region13
    $region12: #{tpu_custom_call.1} parent=1 // pred_region
      %54 = vsyncadd [#allocation6], 0
      %s55 = sshll.u32 %s2, 4
      %s56 = int_to_ptr.hbm [resolvable:$true] %s55
      %s57 = sshll.u32 [#allocation7], 4
      %s58 = int_to_ptr.vmem [resolvable:$true] %s57
      %63 = dma.hbm_to_vmem [thread:$0]  %s56, 512, %s58, [#allocation6], 128, 128, 8
    $region13: #{tpu_custom_call.1} parent=1 // pred_fallthru
      _
    // Predicated region
    $region14: #{tpu_custom_call.1} parent=1 // pred_check
      _
    $region15: #{tpu_custom_call.1} parent=1 // pred_check_branch
      %65 = sbr.rel (0) target = $region17
    $region16: #{tpu_custom_call.1} parent=1 // pred_region
      _
    $region17: #{tpu_custom_call.1} parent=1 // pred_fallthru
      _
    // Predicated region
    $region18: #{tpu_custom_call.1} parent=1 // pred_check
      _
    $region19: #{tpu_custom_call.1} parent=1 // pred_check_branch
      %67 = sbr.rel (0) target = $region21
    $region20: #{tpu_custom_call.1} parent=1 // pred_region
      %69 = vsyncadd [#allocation9], 0
      %s70 = sshll.u32 %s4, 4
      %s71 = int_to_ptr.hbm [resolvable:$true] %s70
      %s72 = sshll.u32 [#allocation8], 4
      %s73 = int_to_ptr.vmem [resolvable:$true] %s72
      %78 = dma.hbm_to_vmem [thread:$0]  %s71, 6144, %s73, [#allocation9], 128, 128, 8
    $region21: #{tpu_custom_call.1} parent=1 // pred_fallthru
      _
    // Predicated region
    $region22: #{tpu_custom_call.1} parent=1 // pred_check
      _
    $region23: #{tpu_custom_call.1} parent=1 // pred_check_branch
      %80 = sbr.rel (0) target = $region25
    $region24: #{tpu_custom_call.1} parent=1 // pred_region
      _
    $region25: #{tpu_custom_call.1} parent=1 // pred_fallthru
      _
    // Predicated region
    $region26: #{tpu_custom_call.1} parent=1 // pred_check
      _
    $region27: #{tpu_custom_call.1} parent=1 // pred_check_branch
      %82 = sbr.rel (0) target = $region29
    $region28: #{tpu_custom_call.1} parent=1 // pred_region
      _
    $region29: #{tpu_custom_call.1} parent=1 // pred_fallthru
      _
    // Predicated region
    $region30: #{tpu_custom_call.1} parent=1 // pred_check
      _
    $region31: #{tpu_custom_call.1} parent=1 // pred_check_branch
      %84 = sbr.rel (0) target = $region33
    $region32: #{tpu_custom_call.1} parent=1 // pred_region
      %86 = vsyncadd [#allocation9], 0
      %s87 = sshll.u32 %s7, 4
      %s88 = int_to_ptr.hbm [resolvable:$true] %s87
      %s89 = sshll.u32 [#allocation10], 4
      %s90 = int_to_ptr.vmem [resolvable:$true] %s89
      %95 = dma.hbm_to_vmem [thread:$0]  %s88, 6144, %s90, [#allocation9], 128, 128, 8
    $region33: #{tpu_custom_call.1} parent=1 // pred_fallthru
      _
    // Predicated region
    $region34: #{tpu_custom_call.1} parent=1 // pred_check
      _
    $region35: #{tpu_custom_call.1} parent=1 // pred_check_branch
      %97 = sbr.rel (0) target = $region37
    $region36: #{tpu_custom_call.1} parent=1 // pred_region
      _
    $region37: #{tpu_custom_call.1} parent=1 // pred_fallthru
      _
    // Predicated region
    $region38: #{tpu_custom_call.1} parent=1 // pred_check
      _
    $region39: #{tpu_custom_call.1} parent=1 // pred_check_branch
      %99 = sbr.rel (0) target = $region41
    $region40: #{tpu_custom_call.1} parent=1 // pred_region
      _
    $region41: #{tpu_custom_call.1} parent=1 // pred_fallthru
      _
    // Predicated region
    $region42: #{tpu_custom_call.1} parent=1 // pred_check
      _
    $region43: #{tpu_custom_call.1} parent=1 // pred_check_branch
      %101 = sbr.rel (0) target = $region45
    $region44: #{tpu_custom_call.1} parent=1 // pred_region
      %103 = vsyncadd [#allocation12], 0
      %s104 = sshll.u32 %s10, 4
      %s105 = int_to_ptr.hbm [resolvable:$true] %s104
      %s106 = sshll.u32 [#allocation11], 4
      %s107 = int_to_ptr.vmem [resolvable:$true] %s106
      %112 = dma.hbm_to_vmem [thread:$0]  %s105, 6144, %s107, [#allocation12], 128, 128, 8
    $region45: #{tpu_custom_call.1} parent=1 // pred_fallthru
      _
    // Predicated region
    $region46: #{tpu_custom_call.1} parent=1 // pred_check
      _
    $region47: #{tpu_custom_call.1} parent=1 // pred_check_branch
      %114 = sbr.rel (0) target = $region49
    $region48: #{tpu_custom_call.1} parent=1 // pred_region
      _
    $region49: #{tpu_custom_call.1} parent=1 // pred_fallthru
      _
    // Predicated region
    $region50: #{tpu_custom_call.1} parent=1 // pred_check
      _
    $region51: #{tpu_custom_call.1} parent=1 // pred_check_branch
      %116 = sbr.rel (0) target = $region53
    $region52: #{tpu_custom_call.1} parent=1 // pred_region
      _
    $region53: #{tpu_custom_call.1} parent=1 // pred_fallthru
      _
    // Predicated region
    $region54: #{tpu_custom_call.1} parent=1 // pred_check
      _
    $region55: #{tpu_custom_call.1} parent=1 // pred_check_branch
      %118 = sbr.rel (0) target = $region57
    $region56: #{tpu_custom_call.1} parent=1 // pred_region
      _
    $region57: #{tpu_custom_call.1} parent=1 // pred_fallthru
      _
    // Predicated region
    $region58: #{tpu_custom_call.1} parent=1 // pred_check
      _
    $region59: #{tpu_custom_call.1} parent=1 // pred_check_branch
      %120 = sbr.rel (0) target = $region61
    $region60: #{tpu_custom_call.1} parent=1 // pred_region
      _
    $region61: #{tpu_custom_call.1} parent=1 // pred_fallthru
      _
    // Predicated region
    $region62: #{tpu_custom_call.1} parent=1 // pred_check
      _
    $region63: #{tpu_custom_call.1} parent=1 // pred_check_branch
      %122 = sbr.rel (0) target = $region65
    $region64: #{tpu_custom_call.1} parent=1 // pred_region
      %124 = dma.done [#allocation3], 512
    $region65: #{tpu_custom_call.1} parent=1 // pred_fallthru
      _
    // Predicated region
    $region66: #{tpu_custom_call.1} parent=1 // pred_check
      _
    $region67: #{tpu_custom_call.1} parent=1 // pred_check_branch
      %126 = sbr.rel (0) target = $region69
    $region68: #{tpu_custom_call.1} parent=1 // pred_region
      %128 = dma.done [#allocation6], 512
    $region69: #{tpu_custom_call.1} parent=1 // pred_fallthru
      _
    // Predicated region
    $region70: #{tpu_custom_call.1} parent=1 // pred_check
      _
    $region71: #{tpu_custom_call.1} parent=1 // pred_check_branch
      %130 = sbr.rel (0) target = $region73
    $region72: #{tpu_custom_call.1} parent=1 // pred_region
      %132 = dma.done [#allocation6], 512
    $region73: #{tpu_custom_call.1} parent=1 // pred_fallthru
      _
    // Predicated region
    $region74: #{tpu_custom_call.1} parent=1 // pred_check
      _
    $region75: #{tpu_custom_call.1} parent=1 // pred_check_branch
      %134 = sbr.rel (0) target = $region77
    $region76: #{tpu_custom_call.1} parent=1 // pred_region
      %136 = dma.done [#allocation9], 6144
    $region77: #{tpu_custom_call.1} parent=1 // pred_fallthru
      _
    // Predicated region
    $region78: #{tpu_custom_call.1} parent=1 // pred_check
      _
    $region79: #{tpu_custom_call.1} parent=1 // pred_check_branch
      %138 = sbr.rel (0) target = $region81
    $region80: #{tpu_custom_call.1} parent=1 // pred_region
      %140 = dma.done [#allocation9], 6144
    $region81: #{tpu_custom_call.1} parent=1 // pred_fallthru
      _
    // Predicated region
    $region82: #{tpu_custom_call.1} parent=1 // pred_check
      _
    $region83: #{tpu_custom_call.1} parent=1 // pred_check_branch
      %142 = sbr.rel (0) target = $region85
    $region84: #{tpu_custom_call.1} parent=1 // pred_region
      %144 = dma.done [#allocation12], 6144
    $region85: #{tpu_custom_call.1} parent=1 // pred_fallthru
      _
    %v145 = vld [vmem:[#allocation5] sm:$0xff]
    %v146 = vld [vmem:[#allocation5 + $0x8] sm:$0xff]
    %v147 = vld [vmem:[#allocation5 + $0x10] sm:$0xff]
    %v148 = vld [vmem:[#allocation5 + $0x18] sm:$0xff]
    %v149 = vld [vmem:[#allocation7] sm:$0xff]
    %v150 = vld [vmem:[#allocation7 + $0x8] sm:$0xff]
    %v151 = vld [vmem:[#allocation7 + $0x10] sm:$0xff]
    %v152 = vld [vmem:[#allocation7 + $0x18] sm:$0xff]
    %v153 = vld [vmem:[%s3] sm:$0xff]
    %v154 = vld [vmem:[%s3 + $0x8] sm:$0xff]
    %v155 = vld [vmem:[%s3 + $0x10] sm:$0xff]
    %v156 = vld [vmem:[%s3 + $0x18] sm:$0xff]
    %v157 = vld [vmem:[%s3 + $0x20] sm:$0xff]
    %v158 = vld [vmem:[%s3 + $0x28] sm:$0xff]
    %v159 = vld [vmem:[%s3 + $0x30] sm:$0xff]
    %v160 = vld [vmem:[%s3 + $0x38] sm:$0xff]
    %v161 = vld [vmem:[%s3 + $0x40] sm:$0xff]
    %v162 = vld [vmem:[%s3 + $0x48] sm:$0xff]
    %v163 = vld [vmem:[%s3 + $0x50] sm:$0xff]
    %v164 = vld [vmem:[%s3 + $0x58] sm:$0xff]
    %v165 = vld [vmem:[%s3 + $0x60] sm:$0xff]
    %v166 = vld [vmem:[%s3 + $0x68] sm:$0xff]
    %v167 = vld [vmem:[%s3 + $0x70] sm:$0xff]
    %v168 = vld [vmem:[%s3 + $0x78] sm:$0xff]
    %v169 = vld [vmem:[#allocation2] sm:$0xff]
    %v170 = vld [vmem:[#allocation2 + $0x8] sm:$0xff]
    %v171 = vld [vmem:[#allocation2 + $0x10] sm:$0xff]
    %v172 = vld [vmem:[#allocation2 + $0x18] sm:$0xff]
    %v173 = vld [vmem:[%s5] sm:$0x1]
    %v174 = vld [vmem:[%s6] sm:$0x1]
    %vm175 = vcmask 261120
    %v177 = vsel %vm175, %v145, 0
    %v180 = vsel %vm175, %v146, 0
    %v183 = vsel %vm175, %v147, 0
    %v186 = vsel %vm175, %v148, 0
    %188 = vmatpush.msra.mxu0 0.0
    %189 = vmatpush.msra.mxu0 0.0
    %190 = vmatpush.msra.mxu0 0.0
    %191 = vmatpush.msra.mxu0 0.0
    %192 = vmatpush.msra.mxu0 0.0
    %193 = vmatpush.msra.mxu0 0.0
    %194 = vmatpush.msra.mxu0 0.0
    %195 = vmatpush.msra.mxu0 0.0
    %196 = vmatpush.msra.mxu0 0.0
    %197 = vmatpush.msra.mxu0 0.0
    %198 = vmatpush.msra.mxu0 0.0
    %199 = vmatpush.msra.mxu0 0.0
    %200 = vmatpush.msra.mxu0 %v172
    %201 = vmatpush.msra.mxu0 %v171
    %202 = vmatpush.msra.mxu0 %v170
    %203 = vmatpush.msra.mxu0 %v169
    %204 = vmatmul.f32.gmra.mxu0 %v177
    %v205 = vpop.f32.mrf.mxu0
    %v206 = vadd.f32 0.0, %v205
    %207 = vmatmul.f32.gmra.mxu0 %v180
    %v208 = vpop.f32.mrf.mxu0
    %v209 = vadd.f32 0.0, %v208
    %210 = vmatmul.f32.gmra.mxu0 %v183
    %v211 = vpop.f32.mrf.mxu0
    %v212 = vadd.f32 0.0, %v211
    %213 = vmatmul.f32.gmra.mxu0 %v186
    %v214 = vpop.f32.mrf.mxu0
    %v215 = vadd.f32 0.0, %v214
    %216 = vdwg.mxu0
    %v218 = vsel %vm175, %v149, 0
    %v221 = vsel %vm175, %v150, 0
    %v224 = vsel %vm175, %v151, 0
    %v227 = vsel %vm175, %v152, 0
    %229 = vmatpush.msra.mxu0 0.0
    %230 = vmatpush.msra.mxu0 0.0
    %231 = vmatpush.msra.mxu0 0.0
    %232 = vmatpush.msra.mxu0 0.0
    %233 = vmatpush.msra.mxu0 0.0
    %234 = vmatpush.msra.mxu0 0.0
    %235 = vmatpush.msra.mxu0 0.0
    %236 = vmatpush.msra.mxu0 0.0
    %237 = vmatpush.msra.mxu0 0.0
    %238 = vmatpush.msra.mxu0 0.0
    %239 = vmatpush.msra.mxu0 0.0
    %240 = vmatpush.msra.mxu0 0.0
    %241 = vmatpush.msra.mxu0 %v172
    %242 = vmatpush.msra.mxu0 %v171
    %243 = vmatpush.msra.mxu0 %v170
    %244 = vmatpush.msra.mxu0 %v169
    %245 = vmatmul.f32.gmra.mxu0 %v218
    %v246 = vpop.f32.mrf.mxu0
    %v247 = vadd.f32 0.0, %v246
    %248 = vmatmul.f32.gmra.mxu0 %v221
    %v249 = vpop.f32.mrf.mxu0
    %v250 = vadd.f32 0.0, %v249
    %251 = vmatmul.f32.gmra.mxu0 %v224
    %v252 = vpop.f32.mrf.mxu0
    %v253 = vadd.f32 0.0, %v252
    %254 = vmatmul.f32.gmra.mxu0 %v227
    %v255 = vpop.f32.mrf.mxu0
    %v256 = vadd.f32 0.0, %v255
    %257 = vdwg.mxu0
    %v258 = vld [vmem:[#allocation8] sm:$0xff]
    %v259 = vld [vmem:[#allocation8 + $0x8] sm:$0xff]
    %v260 = vld [vmem:[#allocation8 + $0x10] sm:$0xff]
    %v261 = vld [vmem:[#allocation8 + $0x18] sm:$0xff]
    %v262 = vld [vmem:[#allocation8 + $0x20] sm:$0xff]
    %v263 = vld [vmem:[#allocation8 + $0x28] sm:$0xff]
    %v264 = vld [vmem:[#allocation8 + $0x30] sm:$0xff]
    %v265 = vld [vmem:[#allocation8 + $0x38] sm:$0xff]
    %v266 = vld [vmem:[#allocation8 + $0x40] sm:$0xff]
    %v267 = vld [vmem:[#allocation8 + $0x48] sm:$0xff]
    %v268 = vld [vmem:[#allocation8 + $0x50] sm:$0xff]
    %v269 = vld [vmem:[#allocation8 + $0x58] sm:$0xff]
    %v270 = vld [vmem:[#allocation8 + $0x60] sm:$0xff]
    %v271 = vld [vmem:[#allocation8 + $0x68] sm:$0xff]
    %v272 = vld [vmem:[#allocation8 + $0x70] sm:$0xff]
    %v273 = vld [vmem:[#allocation8 + $0x78] sm:$0xff]
    %s274 = scalar_lea.vmem [#allocation8], 128
    %v275 = vld [vmem:[%s274] sm:$0xff]
    %v276 = vld [vmem:[%s274 + $0x8] sm:$0xff]
    %v277 = vld [vmem:[%s274 + $0x10] sm:$0xff]
    %v278 = vld [vmem:[%s274 + $0x18] sm:$0xff]
    %v279 = vld [vmem:[%s274 + $0x20] sm:$0xff]
    %v280 = vld [vmem:[%s274 + $0x28] sm:$0xff]
    %v281 = vld [vmem:[%s274 + $0x30] sm:$0xff]
    %v282 = vld [vmem:[%s274 + $0x38] sm:$0xff]
    %v283 = vld [vmem:[%s274 + $0x40] sm:$0xff]
    %v284 = vld [vmem:[%s274 + $0x48] sm:$0xff]
    %v285 = vld [vmem:[%s274 + $0x50] sm:$0xff]
    %v286 = vld [vmem:[%s274 + $0x58] sm:$0xff]
    %v287 = vld [vmem:[%s274 + $0x60] sm:$0xff]
    %v288 = vld [vmem:[%s274 + $0x68] sm:$0xff]
    %v289 = vld [vmem:[%s274 + $0x70] sm:$0xff]
    %v290 = vld [vmem:[%s274 + $0x78] sm:$0xff]
    %291 = vmatpush.msra.mxu0 %v290
    %292 = vmatpush.msra.mxu0 %v289
    %293 = vmatpush.msra.mxu0 %v288
    %294 = vmatpush.msra.mxu0 %v287
    %295 = vmatpush.msra.mxu0 %v286
    %296 = vmatpush.msra.mxu0 %v285
    %297 = vmatpush.msra.mxu0 %v284
    %298 = vmatpush.msra.mxu0 %v283
    %299 = vmatpush.msra.mxu0 %v282
    %300 = vmatpush.msra.mxu0 %v281
    %301 = vmatpush.msra.mxu0 %v280
    %302 = vmatpush.msra.mxu0 %v279
    %303 = vmatpush.msra.mxu0 %v278
    %304 = vmatpush.msra.mxu0 %v277
    %305 = vmatpush.msra.mxu0 %v276
    %306 = vmatpush.msra.mxu0 %v275
    %307 = vmatmul.f32.gmra.mxu0 %v169
    %v308 = vpop.f32.mrf.mxu0
    %v309 = vadd.f32 0.0, %v308
    %310 = vmatmul.f32.gmra.mxu0 %v170
    %v311 = vpop.f32.mrf.mxu0
    %v312 = vadd.f32 0.0, %v311
    %313 = vmatmul.f32.gmra.mxu0 %v171
    %v314 = vpop.f32.mrf.mxu0
    %v315 = vadd.f32 0.0, %v314
    %316 = vmatmul.f32.gmra.mxu0 %v172
    %v317 = vpop.f32.mrf.mxu0
    %v318 = vadd.f32 0.0, %v317
    %319 = vdwg.mxu0
    %320 = vmatpush.msra.mxu0 %v273
    %321 = vmatpush.msra.mxu0 %v272
    %322 = vmatpush.msra.mxu0 %v271
    %323 = vmatpush.msra.mxu0 %v270
    %324 = vmatpush.msra.mxu0 %v269
    %325 = vmatpush.msra.mxu0 %v268
    %326 = vmatpush.msra.mxu0 %v267
    %327 = vmatpush.msra.mxu0 %v266
    %328 = vmatpush.msra.mxu0 %v265
    %329 = vmatpush.msra.mxu0 %v264
    %330 = vmatpush.msra.mxu0 %v263
    %331 = vmatpush.msra.mxu0 %v262
    %332 = vmatpush.msra.mxu0 %v261
    %333 = vmatpush.msra.mxu0 %v260
    %334 = vmatpush.msra.mxu0 %v259
    %335 = vmatpush.msra.mxu0 %v258
    %336 = vmatmul.f32.gmra.mxu0 %v206
    %v337 = vpop.f32.mrf.mxu0
    %v338 = vadd.f32 %v309, %v337
    %339 = vmatmul.f32.gmra.mxu0 %v209
    %v340 = vpop.f32.mrf.mxu0
    %v341 = vadd.f32 %v312, %v340
    %342 = vmatmul.f32.gmra.mxu0 %v212
    %v343 = vpop.f32.mrf.mxu0
    %v344 = vadd.f32 %v315, %v343
    %345 = vmatmul.f32.gmra.mxu0 %v215
    %v346 = vpop.f32.mrf.mxu0
    %v347 = vadd.f32 %v318, %v346
    %348 = vdwg.mxu0
    %s349 = scalar_lea.vmem [#allocation8], 256
    %v350 = vld [vmem:[%s349] sm:$0xff]
    %v351 = vld [vmem:[%s349 + $0x8] sm:$0xff]
    %v352 = vld [vmem:[%s349 + $0x10] sm:$0xff]
    %v353 = vld [vmem:[%s349 + $0x18] sm:$0xff]
    %v354 = vld [vmem:[%s349 + $0x20] sm:$0xff]
    %v355 = vld [vmem:[%s349 + $0x28] sm:$0xff]
    %v356 = vld [vmem:[%s349 + $0x30] sm:$0xff]
    %v357 = vld [vmem:[%s349 + $0x38] sm:$0xff]
    %v358 = vld [vmem:[%s349 + $0x40] sm:$0xff]
    %v359 = vld [vmem:[%s349 + $0x48] sm:$0xff]
    %v360 = vld [vmem:[%s349 + $0x50] sm:$0xff]
    %v361 = vld [vmem:[%s349 + $0x58] sm:$0xff]
    %v362 = vld [vmem:[%s349 + $0x60] sm:$0xff]
    %v363 = vld [vmem:[%s349 + $0x68] sm:$0xff]
    %v364 = vld [vmem:[%s349 + $0x70] sm:$0xff]
    %v365 = vld [vmem:[%s349 + $0x78] sm:$0xff]
    %366 = vmatpush.msra.mxu0 %v365
    %367 = vmatpush.msra.mxu0 %v364
    %368 = vmatpush.msra.mxu0 %v363
    %369 = vmatpush.msra.mxu0 %v362
    %370 = vmatpush.msra.mxu0 %v361
    %371 = vmatpush.msra.mxu0 %v360
    %372 = vmatpush.msra.mxu0 %v359
    %373 = vmatpush.msra.mxu0 %v358
    %374 = vmatpush.msra.mxu0 %v357
    %375 = vmatpush.msra.mxu0 %v356
    %376 = vmatpush.msra.mxu0 %v355
    %377 = vmatpush.msra.mxu0 %v354
    %378 = vmatpush.msra.mxu0 %v353
    %379 = vmatpush.msra.mxu0 %v352
    %380 = vmatpush.msra.mxu0 %v351
    %381 = vmatpush.msra.mxu0 %v350
    %382 = vmatmul.f32.gmra.mxu0 %v247
    %v383 = vpop.f32.mrf.mxu0
    %v384 = vadd.f32 0.0, %v383
    %385 = vmatmul.f32.gmra.mxu0 %v250
    %v386 = vpop.f32.mrf.mxu0
    %v387 = vadd.f32 0.0, %v386
    %388 = vmatmul.f32.gmra.mxu0 %v253
    %v389 = vpop.f32.mrf.mxu0
    %v390 = vadd.f32 0.0, %v389
    %391 = vmatmul.f32.gmra.mxu0 %v256
    %v392 = vpop.f32.mrf.mxu0
    %v393 = vadd.f32 0.0, %v392
    %394 = vdwg.mxu0
    %v395 = vadd.f32 %v338, %v384
    %v396 = vadd.f32 %v341, %v387
    %v397 = vadd.f32 %v344, %v390
    %v398 = vadd.f32 %v347, %v393
    %v399 = vadd.f32 %v395, %v396
    %v400 = vadd.f32 %v399, %v397
    %v401 = vadd.f32 %v400, %v398
    %v402 = vrot.slane %v401, 4
    %v403 = vadd.f32 %v401, %v402
    %v404 = vrot.slane %v403, 2
    %v405 = vadd.f32 %v403, %v404
    %v406 = vrot.slane %v405, 1
    %v407 = vadd.f32 %v405, %v406
    %v408 = vmul.f32 %v395, %v395
    %v409 = vmul.f32 %v396, %v396
    %v410 = vmul.f32 %v397, %v397
    %v411 = vmul.f32 %v398, %v398
    %v412 = vadd.f32 %v408, %v409
    %v413 = vadd.f32 %v412, %v410
    %v414 = vadd.f32 %v413, %v411
    %v415 = vrot.slane %v414, 4
    %v416 = vadd.f32 %v414, %v415
    %v417 = vrot.slane %v416, 2
    %v418 = vadd.f32 %v416, %v417
    %v419 = vrot.slane %v418, 1
    %v420 = vadd.f32 %v418, %v419
    %421 = vmatpush.msra.mxu0 %v168
    %422 = vmatpush.msra.mxu0 %v167
    %423 = vmatpush.msra.mxu0 %v166
    %424 = vmatpush.msra.mxu0 %v165
    %425 = vmatpush.msra.mxu0 %v164
    %426 = vmatpush.msra.mxu0 %v163
    %427 = vmatpush.msra.mxu0 %v162
    %428 = vmatpush.msra.mxu0 %v161
    %429 = vmatpush.msra.mxu0 %v160
    %430 = vmatpush.msra.mxu0 %v159
    %431 = vmatpush.msra.mxu0 %v158
    %432 = vmatpush.msra.mxu0 %v157
    %433 = vmatpush.msra.mxu0 %v156
    %434 = vmatpush.msra.mxu0 %v155
    %435 = vmatpush.msra.mxu0 %v154
    %436 = vmatpush.msra.mxu0 %v153
    %437 = vmatmul.f32.gmra.mxu0 %v407
    %v438 = vpop.f32.mrf.mxu0
    %v439 = vadd.f32 0.0, %v438
    %440 = vdwg.mxu0
    %441 = vmatpush.msra.mxu0 %v168
    %442 = vmatpush.msra.mxu0 %v167
    %443 = vmatpush.msra.mxu0 %v166
    %444 = vmatpush.msra.mxu0 %v165
    %445 = vmatpush.msra.mxu0 %v164
    %446 = vmatpush.msra.mxu0 %v163
    %447 = vmatpush.msra.mxu0 %v162
    %448 = vmatpush.msra.mxu0 %v161
    %449 = vmatpush.msra.mxu0 %v160
    %450 = vmatpush.msra.mxu0 %v159
    %451 = vmatpush.msra.mxu0 %v158
    %452 = vmatpush.msra.mxu0 %v157
    %453 = vmatpush.msra.mxu0 %v156
    %454 = vmatpush.msra.mxu0 %v155
    %455 = vmatpush.msra.mxu0 %v154
    %456 = vmatpush.msra.mxu0 %v153
    %457 = vmatmul.f32.gmra.mxu0 %v420
    %v458 = vpop.f32.mrf.mxu0
    %v459 = vadd.f32 0.0, %v458
    %460 = vdwg.mxu0
    %v461 = vmul.f32 %v439, %v439
    %v462 = vsub.f32 %v459, %v461
    %v463 = vperm.slane %v439, 0
    %v464 = vsub.f32 %v395, %v463
    %v465 = vsub.f32 %v396, %v463
    %v466 = vsub.f32 %v397, %v463
    %v467 = vsub.f32 %v398, %v463
    %v468 = vadd.f32 %v462, 1e-05
    %v469 = vrsqrt.pop %v468
    %v470 = vmul.f32 %v469, %v468
    %v471 = vmul.f32 %v470, %v469
    %v472 = vmul.f32 0.5, %v471
    %v473 = vsub.f32 1.5, %v472
    %v474 = vmul.f32 %v469, %v473
    %vm475 = vweird.f32 %v468
    %vm476 = vweird.f32 %v469
    %vm477 = vmor %vm475, %vm476
    %v478 = vsel %vm477, %v469, %v474
    %v479 = vperm.slane %v478, 0
    %v480 = vmul.f32 %v464, %v479
    %v481 = vmul.f32 %v465, %v479
    %v482 = vmul.f32 %v466, %v479
    %v483 = vmul.f32 %v467, %v479
    %v485 = vperm.slane %v173, 0
    %v487 = vmul.f32 %v480, %v485
    %v488 = vmul.f32 %v481, %v485
    %v489 = vmul.f32 %v482, %v485
    %v490 = vmul.f32 %v483, %v485
    %v492 = vperm.slane %v174, 0
    %v494 = vadd.f32 %v487, %v492
    %v495 = vadd.f32 %v488, %v492
    %v496 = vadd.f32 %v489, %v492
    %v497 = vadd.f32 %v490, %v492
    %v498 = vmax.f32 %v494, 0.0
    %v499 = vmax.f32 %v495, 0.0
    %v500 = vmax.f32 %v496, 0.0
    %v501 = vmax.f32 %v497, 0.0
    %v502 = vld [vmem:[%s8] sm:$0x1]
    %v503 = vld [vmem:[%s9] sm:$0x1]
    %504 = vmatpush.msra.mxu0 0.0
    %505 = vmatpush.msra.mxu0 0.0
    %506 = vmatpush.msra.mxu0 0.0
    %507 = vmatpush.msra.mxu0 0.0
    %508 = vmatpush.msra.mxu0 0.0
    %509 = vmatpush.msra.mxu0 0.0
    %510 = vmatpush.msra.mxu0 0.0
    %511 = vmatpush.msra.mxu0 0.0
    %512 = vmatpush.msra.mxu0 0.0
    %513 = vmatpush.msra.mxu0 0.0
    %514 = vmatpush.msra.mxu0 0.0
    %515 = vmatpush.msra.mxu0 0.0
    %516 = vmatpush.msra.mxu0 %v501
    %517 = vmatpush.msra.mxu0 %v500
    %518 = vmatpush.msra.mxu0 %v499
    %519 = vmatpush.msra.mxu0 %v498
    %520 = vmatmul.f32.gmra.mxu0 %v177
    %v521 = vpop.f32.mrf.mxu0
    %v522 = vadd.f32 0.0, %v521
    %523 = vmatmul.f32.gmra.mxu0 %v180
    %v524 = vpop.f32.mrf.mxu0
    %v525 = vadd.f32 0.0, %v524
    %526 = vmatmul.f32.gmra.mxu0 %v183
    %v527 = vpop.f32.mrf.mxu0
    %v528 = vadd.f32 0.0, %v527
    %529 = vmatmul.f32.gmra.mxu0 %v186
    %v530 = vpop.f32.mrf.mxu0
    %v531 = vadd.f32 0.0, %v530
    %532 = vdwg.mxu0
    %533 = vmatpush.msra.mxu0 0.0
    %534 = vmatpush.msra.mxu0 0.0
    %535 = vmatpush.msra.mxu0 0.0
    %536 = vmatpush.msra.mxu0 0.0
    %537 = vmatpush.msra.mxu0 0.0
    %538 = vmatpush.msra.mxu0 0.0
    %539 = vmatpush.msra.mxu0 0.0
    %540 = vmatpush.msra.mxu0 0.0
    %541 = vmatpush.msra.mxu0 0.0
    %542 = vmatpush.msra.mxu0 0.0
    %543 = vmatpush.msra.mxu0 0.0
    %544 = vmatpush.msra.mxu0 0.0
    %545 = vmatpush.msra.mxu0 %v501
    %546 = vmatpush.msra.mxu0 %v500
    %547 = vmatpush.msra.mxu0 %v499
    %548 = vmatpush.msra.mxu0 %v498
    %549 = vmatmul.f32.gmra.mxu0 %v218
    %v550 = vpop.f32.mrf.mxu0
    %v551 = vadd.f32 0.0, %v550
    %552 = vmatmul.f32.gmra.mxu0 %v221
    %v553 = vpop.f32.mrf.mxu0
    %v554 = vadd.f32 0.0, %v553
    %555 = vmatmul.f32.gmra.mxu0 %v224
    %v556 = vpop.f32.mrf.mxu0
    %v557 = vadd.f32 0.0, %v556
    %558 = vmatmul.f32.gmra.mxu0 %v227
    %v559 = vpop.f32.mrf.mxu0
    %v560 = vadd.f32 0.0, %v559
    %561 = vdwg.mxu0
    %v562 = vld [vmem:[#allocation10] sm:$0xff]
    %v563 = vld [vmem:[#allocation10 + $0x8] sm:$0xff]
    %v564 = vld [vmem:[#allocation10 + $0x10] sm:$0xff]
    %v565 = vld [vmem:[#allocation10 + $0x18] sm:$0xff]
    %v566 = vld [vmem:[#allocation10 + $0x20] sm:$0xff]
    %v567 = vld [vmem:[#allocation10 + $0x28] sm:$0xff]
    %v568 = vld [vmem:[#allocation10 + $0x30] sm:$0xff]
    %v569 = vld [vmem:[#allocation10 + $0x38] sm:$0xff]
    %v570 = vld [vmem:[#allocation10 + $0x40] sm:$0xff]
    %v571 = vld [vmem:[#allocation10 + $0x48] sm:$0xff]
    %v572 = vld [vmem:[#allocation10 + $0x50] sm:$0xff]
    %v573 = vld [vmem:[#allocation10 + $0x58] sm:$0xff]
    %v574 = vld [vmem:[#allocation10 + $0x60] sm:$0xff]
    %v575 = vld [vmem:[#allocation10 + $0x68] sm:$0xff]
    %v576 = vld [vmem:[#allocation10 + $0x70] sm:$0xff]
    %v577 = vld [vmem:[#allocation10 + $0x78] sm:$0xff]
    %s578 = scalar_lea.vmem [#allocation10], 128
    %v579 = vld [vmem:[%s578] sm:$0xff]
    %v580 = vld [vmem:[%s578 + $0x8] sm:$0xff]
    %v581 = vld [vmem:[%s578 + $0x10] sm:$0xff]
    %v582 = vld [vmem:[%s578 + $0x18] sm:$0xff]
    %v583 = vld [vmem:[%s578 + $0x20] sm:$0xff]
    %v584 = vld [vmem:[%s578 + $0x28] sm:$0xff]
    %v585 = vld [vmem:[%s578 + $0x30] sm:$0xff]
    %v586 = vld [vmem:[%s578 + $0x38] sm:$0xff]
    %v587 = vld [vmem:[%s578 + $0x40] sm:$0xff]
    %v588 = vld [vmem:[%s578 + $0x48] sm:$0xff]
    %v589 = vld [vmem:[%s578 + $0x50] sm:$0xff]
    %v590 = vld [vmem:[%s578 + $0x58] sm:$0xff]
    %v591 = vld [vmem:[%s578 + $0x60] sm:$0xff]
    %v592 = vld [vmem:[%s578 + $0x68] sm:$0xff]
    %v593 = vld [vmem:[%s578 + $0x70] sm:$0xff]
    %v594 = vld [vmem:[%s578 + $0x78] sm:$0xff]
    %595 = vmatpush.msra.mxu0 %v594
    %596 = vmatpush.msra.mxu0 %v593
    %597 = vmatpush.msra.mxu0 %v592
    %598 = vmatpush.msra.mxu0 %v591
    %599 = vmatpush.msra.mxu0 %v590
    %600 = vmatpush.msra.mxu0 %v589
    %601 = vmatpush.msra.mxu0 %v588
    %602 = vmatpush.msra.mxu0 %v587
    %603 = vmatpush.msra.mxu0 %v586
    %604 = vmatpush.msra.mxu0 %v585
    %605 = vmatpush.msra.mxu0 %v584
    %606 = vmatpush.msra.mxu0 %v583
    %607 = vmatpush.msra.mxu0 %v582
    %608 = vmatpush.msra.mxu0 %v581
    %609 = vmatpush.msra.mxu0 %v580
    %610 = vmatpush.msra.mxu0 %v579
    %611 = vmatmul.f32.gmra.mxu0 %v498
    %v612 = vpop.f32.mrf.mxu0
    %v613 = vadd.f32 0.0, %v612
    %614 = vmatmul.f32.gmra.mxu0 %v499
    %v615 = vpop.f32.mrf.mxu0
    %v616 = vadd.f32 0.0, %v615
    %617 = vmatmul.f32.gmra.mxu0 %v500
    %v618 = vpop.f32.mrf.mxu0
    %v619 = vadd.f32 0.0, %v618
    %620 = vmatmul.f32.gmra.mxu0 %v501
    %v621 = vpop.f32.mrf.mxu0
    %v622 = vadd.f32 0.0, %v621
    %623 = vdwg.mxu0
    %624 = vmatpush.msra.mxu0 %v577
    %625 = vmatpush.msra.mxu0 %v576
    %626 = vmatpush.msra.mxu0 %v575
    %627 = vmatpush.msra.mxu0 %v574
    %628 = vmatpush.msra.mxu0 %v573
    %629 = vmatpush.msra.mxu0 %v572
    %630 = vmatpush.msra.mxu0 %v571
    %631 = vmatpush.msra.mxu0 %v570
    %632 = vmatpush.msra.mxu0 %v569
    %633 = vmatpush.msra.mxu0 %v568
    %634 = vmatpush.msra.mxu0 %v567
    %635 = vmatpush.msra.mxu0 %v566
    %636 = vmatpush.msra.mxu0 %v565
    %637 = vmatpush.msra.mxu0 %v564
    %638 = vmatpush.msra.mxu0 %v563
    %639 = vmatpush.msra.mxu0 %v562
    %640 = vmatmul.f32.gmra.mxu0 %v522
    %v641 = vpop.f32.mrf.mxu0
    %v642 = vadd.f32 %v613, %v641
    %643 = vmatmul.f32.gmra.mxu0 %v525
    %v644 = vpop.f32.mrf.mxu0
    %v645 = vadd.f32 %v616, %v644
    %646 = vmatmul.f32.gmra.mxu0 %v528
    %v647 = vpop.f32.mrf.mxu0
    %v648 = vadd.f32 %v619, %v647
    %649 = vmatmul.f32.gmra.mxu0 %v531
    %v650 = vpop.f32.mrf.mxu0
    %v651 = vadd.f32 %v622, %v650
    %652 = vdwg.mxu0
    %s653 = scalar_lea.vmem [#allocation10], 256
    %v654 = vld [vmem:[%s653] sm:$0xff]
    %v655 = vld [vmem:[%s653 + $0x8] sm:$0xff]
    %v656 = vld [vmem:[%s653 + $0x10] sm:$0xff]
    %v657 = vld [vmem:[%s653 + $0x18] sm:$0xff]
    %v658 = vld [vmem:[%s653 + $0x20] sm:$0xff]
    %v659 = vld [vmem:[%s653 + $0x28] sm:$0xff]
    %v660 = vld [vmem:[%s653 + $0x30] sm:$0xff]
    %v661 = vld [vmem:[%s653 + $0x38] sm:$0xff]
    %v662 = vld [vmem:[%s653 + $0x40] sm:$0xff]
    %v663 = vld [vmem:[%s653 + $0x48] sm:$0xff]
    %v664 = vld [vmem:[%s653 + $0x50] sm:$0xff]
    %v665 = vld [vmem:[%s653 + $0x58] sm:$0xff]
    %v666 = vld [vmem:[%s653 + $0x60] sm:$0xff]
    %v667 = vld [vmem:[%s653 + $0x68] sm:$0xff]
    %v668 = vld [vmem:[%s653 + $0x70] sm:$0xff]
    %v669 = vld [vmem:[%s653 + $0x78] sm:$0xff]
    %670 = vmatpush.msra.mxu0 %v669
    %671 = vmatpush.msra.mxu0 %v668
    %672 = vmatpush.msra.mxu0 %v667
    %673 = vmatpush.msra.mxu0 %v666
    %674 = vmatpush.msra.mxu0 %v665
    %675 = vmatpush.msra.mxu0 %v664
    %676 = vmatpush.msra.mxu0 %v663
    %677 = vmatpush.msra.mxu0 %v662
    %678 = vmatpush.msra.mxu0 %v661
    %679 = vmatpush.msra.mxu0 %v660
    %680 = vmatpush.msra.mxu0 %v659
    %681 = vmatpush.msra.mxu0 %v658
    %682 = vmatpush.msra.mxu0 %v657
    %683 = vmatpush.msra.mxu0 %v656
    %684 = vmatpush.msra.mxu0 %v655
    %685 = vmatpush.msra.mxu0 %v654
    %686 = vmatmul.f32.gmra.mxu0 %v551
    %v687 = vpop.f32.mrf.mxu0
    %v688 = vadd.f32 0.0, %v687
    %689 = vmatmul.f32.gmra.mxu0 %v554
    %v690 = vpop.f32.mrf.mxu0
    %v691 = vadd.f32 0.0, %v690
    %692 = vmatmul.f32.gmra.mxu0 %v557
    %v693 = vpop.f32.mrf.mxu0
    %v694 = vadd.f32 0.0, %v693
    %695 = vmatmul.f32.gmra.mxu0 %v560
    %v696 = vpop.f32.mrf.mxu0
    %v697 = vadd.f32 0.0, %v696
    %698 = vdwg.mxu0
    %v699 = vadd.f32 %v642, %v688
    %v700 = vadd.f32 %v645, %v691
    %v701 = vadd.f32 %v648, %v694
    %v702 = vadd.f32 %v651, %v697
    %v703 = vadd.f32 %v699, %v700
    %v704 = vadd.f32 %v703, %v701
    %v705 = vadd.f32 %v704, %v702
    %v706 = vrot.slane %v705, 4
    %v707 = vadd.f32 %v705, %v706
    %v708 = vrot.slane %v707, 2
    %v709 = vadd.f32 %v707, %v708
    %v710 = vrot.slane %v709, 1
    %v711 = vadd.f32 %v709, %v710
    %v712 = vmul.f32 %v699, %v699
    %v713 = vmul.f32 %v700, %v700
    %v714 = vmul.f32 %v701, %v701
    %v715 = vmul.f32 %v702, %v702
    %v716 = vadd.f32 %v712, %v713
    %v717 = vadd.f32 %v716, %v714
    %v718 = vadd.f32 %v717, %v715
    %v719 = vrot.slane %v718, 4
    %v720 = vadd.f32 %v718, %v719
    %v721 = vrot.slane %v720, 2
    %v722 = vadd.f32 %v720, %v721
    %v723 = vrot.slane %v722, 1
    %v724 = vadd.f32 %v722, %v723
    %725 = vmatpush.msra.mxu0 %v168
    %726 = vmatpush.msra.mxu0 %v167
    %727 = vmatpush.msra.mxu0 %v166
    %728 = vmatpush.msra.mxu0 %v165
    %729 = vmatpush.msra.mxu0 %v164
    %730 = vmatpush.msra.mxu0 %v163
    %731 = vmatpush.msra.mxu0 %v162
    %732 = vmatpush.msra.mxu0 %v161
    %733 = vmatpush.msra.mxu0 %v160
    %734 = vmatpush.msra.mxu0 %v159
    %735 = vmatpush.msra.mxu0 %v158
    %736 = vmatpush.msra.mxu0 %v157
    %737 = vmatpush.msra.mxu0 %v156
    %738 = vmatpush.msra.mxu0 %v155
    %739 = vmatpush.msra.mxu0 %v154
    %740 = vmatpush.msra.mxu0 %v153
    %741 = vmatmul.f32.gmra.mxu0 %v711
    %v742 = vpop.f32.mrf.mxu0
    %v743 = vadd.f32 0.0, %v742
    %744 = vdwg.mxu0
    %745 = vmatpush.msra.mxu0 %v168
    %746 = vmatpush.msra.mxu0 %v167
    %747 = vmatpush.msra.mxu0 %v166
    %748 = vmatpush.msra.mxu0 %v165
    %749 = vmatpush.msra.mxu0 %v164
    %750 = vmatpush.msra.mxu0 %v163
    %751 = vmatpush.msra.mxu0 %v162
    %752 = vmatpush.msra.mxu0 %v161
    %753 = vmatpush.msra.mxu0 %v160
    %754 = vmatpush.msra.mxu0 %v159
    %755 = vmatpush.msra.mxu0 %v158
    %756 = vmatpush.msra.mxu0 %v157
    %757 = vmatpush.msra.mxu0 %v156
    %758 = vmatpush.msra.mxu0 %v155
    %759 = vmatpush.msra.mxu0 %v154
    %760 = vmatpush.msra.mxu0 %v153
    %761 = vmatmul.f32.gmra.mxu0 %v724
    %v762 = vpop.f32.mrf.mxu0
    %v763 = vadd.f32 0.0, %v762
    %764 = vdwg.mxu0
    %v765 = vmul.f32 %v743, %v743
    %v766 = vsub.f32 %v763, %v765
    %v767 = vperm.slane %v743, 0
    %v768 = vsub.f32 %v699, %v767
    %v769 = vsub.f32 %v700, %v767
    %v770 = vsub.f32 %v701, %v767
    %v771 = vsub.f32 %v702, %v767
    %v772 = vadd.f32 %v766, 1e-05
    %v773 = vrsqrt.pop %v772
    %v774 = vmul.f32 %v773, %v772
    %v775 = vmul.f32 %v774, %v773
    %v776 = vmul.f32 0.5, %v775
    %v777 = vsub.f32 1.5, %v776
    %v778 = vmul.f32 %v773, %v777
    %vm779 = vweird.f32 %v772
    %vm780 = vweird.f32 %v773
    %vm781 = vmor %vm779, %vm780
    %v782 = vsel %vm781, %v773, %v778
    %v783 = vperm.slane %v782, 0
    %v784 = vmul.f32 %v768, %v783
    %v785 = vmul.f32 %v769, %v783
    %v786 = vmul.f32 %v770, %v783
    %v787 = vmul.f32 %v771, %v783
    %v789 = vperm.slane %v502, 0
    %v791 = vmul.f32 %v784, %v789
    %v792 = vmul.f32 %v785, %v789
    %v793 = vmul.f32 %v786, %v789
    %v794 = vmul.f32 %v787, %v789
    %v796 = vperm.slane %v503, 0
    %v798 = vadd.f32 %v791, %v796
    %v799 = vadd.f32 %v792, %v796
    %v800 = vadd.f32 %v793, %v796
    %v801 = vadd.f32 %v794, %v796
    %v802 = vmax.f32 %v798, 0.0
    %v803 = vmax.f32 %v799, 0.0
    %v804 = vmax.f32 %v800, 0.0
    %v805 = vmax.f32 %v801, 0.0
    %v806 = vld [vmem:[%s11] sm:$0x1]
    %v807 = vld [vmem:[%s12] sm:$0x1]
    %808 = vmatpush.msra.mxu0 0.0
    %809 = vmatpush.msra.mxu0 0.0
    %810 = vmatpush.msra.mxu0 0.0
    %811 = vmatpush.msra.mxu0 0.0
    %812 = vmatpush.msra.mxu0 0.0
    %813 = vmatpush.msra.mxu0 0.0
    %814 = vmatpush.msra.mxu0 0.0
    %815 = vmatpush.msra.mxu0 0.0
    %816 = vmatpush.msra.mxu0 0.0
    %817 = vmatpush.msra.mxu0 0.0
    %818 = vmatpush.msra.mxu0 0.0
    %819 = vmatpush.msra.mxu0 0.0
    %820 = vmatpush.msra.mxu0 %v805
    %821 = vmatpush.msra.mxu0 %v804
    %822 = vmatpush.msra.mxu0 %v803
    %823 = vmatpush.msra.mxu0 %v802
    %824 = vmatmul.f32.gmra.mxu0 %v177
    %v825 = vpop.f32.mrf.mxu0
    %v826 = vadd.f32 0.0, %v825
    %827 = vmatmul.f32.gmra.mxu0 %v180
    %v828 = vpop.f32.mrf.mxu0
    %v829 = vadd.f32 0.0, %v828
    %830 = vmatmul.f32.gmra.mxu0 %v183
    %v831 = vpop.f32.mrf.mxu0
    %v832 = vadd.f32 0.0, %v831
    %833 = vmatmul.f32.gmra.mxu0 %v186
    %v834 = vpop.f32.mrf.mxu0
    %v835 = vadd.f32 0.0, %v834
    %836 = vdwg.mxu0
    %837 = vmatpush.msra.mxu0 0.0
    %838 = vmatpush.msra.mxu0 0.0
    %839 = vmatpush.msra.mxu0 0.0
    %840 = vmatpush.msra.mxu0 0.0
    %841 = vmatpush.msra.mxu0 0.0
    %842 = vmatpush.msra.mxu0 0.0
    %843 = vmatpush.msra.mxu0 0.0
    %844 = vmatpush.msra.mxu0 0.0
    %845 = vmatpush.msra.mxu0 0.0
    %846 = vmatpush.msra.mxu0 0.0
    %847 = vmatpush.msra.mxu0 0.0
    %848 = vmatpush.msra.mxu0 0.0
    %849 = vmatpush.msra.mxu0 %v805
    %850 = vmatpush.msra.mxu0 %v804
    %851 = vmatpush.msra.mxu0 %v803
    %852 = vmatpush.msra.mxu0 %v802
    %853 = vmatmul.f32.gmra.mxu0 %v218
    %v854 = vpop.f32.mrf.mxu0
    %v855 = vadd.f32 0.0, %v854
    %856 = vmatmul.f32.gmra.mxu0 %v221
    %v857 = vpop.f32.mrf.mxu0
    %v858 = vadd.f32 0.0, %v857
    %859 = vmatmul.f32.gmra.mxu0 %v224
    %v860 = vpop.f32.mrf.mxu0
    %v861 = vadd.f32 0.0, %v860
    %862 = vmatmul.f32.gmra.mxu0 %v227
    %v863 = vpop.f32.mrf.mxu0
    %v864 = vadd.f32 0.0, %v863
    %865 = vdwg.mxu0
    %v866 = vld [vmem:[#allocation11] sm:$0xff]
    %v867 = vld [vmem:[#allocation11 + $0x8] sm:$0xff]
    %v868 = vld [vmem:[#allocation11 + $0x10] sm:$0xff]
    %v869 = vld [vmem:[#allocation11 + $0x18] sm:$0xff]
    %v870 = vld [vmem:[#allocation11 + $0x20] sm:$0xff]
    %v871 = vld [vmem:[#allocation11 + $0x28] sm:$0xff]
    %v872 = vld [vmem:[#allocation11 + $0x30] sm:$0xff]
    %v873 = vld [vmem:[#allocation11 + $0x38] sm:$0xff]
    %v874 = vld [vmem:[#allocation11 + $0x40] sm:$0xff]
    %v875 = vld [vmem:[#allocation11 + $0x48] sm:$0xff]
    %v876 = vld [vmem:[#allocation11 + $0x50] sm:$0xff]
    %v877 = vld [vmem:[#allocation11 + $0x58] sm:$0xff]
    %v878 = vld [vmem:[#allocation11 + $0x60] sm:$0xff]
    %v879 = vld [vmem:[#allocation11 + $0x68] sm:$0xff]
    %v880 = vld [vmem:[#allocation11 + $0x70] sm:$0xff]
    %v881 = vld [vmem:[#allocation11 + $0x78] sm:$0xff]
    %s882 = scalar_lea.vmem [#allocation11], 128
    %v883 = vld [vmem:[%s882] sm:$0xff]
    %v884 = vld [vmem:[%s882 + $0x8] sm:$0xff]
    %v885 = vld [vmem:[%s882 + $0x10] sm:$0xff]
    %v886 = vld [vmem:[%s882 + $0x18] sm:$0xff]
    %v887 = vld [vmem:[%s882 + $0x20] sm:$0xff]
    %v888 = vld [vmem:[%s882 + $0x28] sm:$0xff]
    %v889 = vld [vmem:[%s882 + $0x30] sm:$0xff]
    %v890 = vld [vmem:[%s882 + $0x38] sm:$0xff]
    %v891 = vld [vmem:[%s882 + $0x40] sm:$0xff]
    %v892 = vld [vmem:[%s882 + $0x48] sm:$0xff]
    %v893 = vld [vmem:[%s882 + $0x50] sm:$0xff]
    %v894 = vld [vmem:[%s882 + $0x58] sm:$0xff]
    %v895 = vld [vmem:[%s882 + $0x60] sm:$0xff]
    %v896 = vld [vmem:[%s882 + $0x68] sm:$0xff]
    %v897 = vld [vmem:[%s882 + $0x70] sm:$0xff]
    %v898 = vld [vmem:[%s882 + $0x78] sm:$0xff]
    %899 = vmatpush.msra.mxu0 %v898
    %900 = vmatpush.msra.mxu0 %v897
    %901 = vmatpush.msra.mxu0 %v896
    %902 = vmatpush.msra.mxu0 %v895
    %903 = vmatpush.msra.mxu0 %v894
    %904 = vmatpush.msra.mxu0 %v893
    %905 = vmatpush.msra.mxu0 %v892
    %906 = vmatpush.msra.mxu0 %v891
    %907 = vmatpush.msra.mxu0 %v890
    %908 = vmatpush.msra.mxu0 %v889
    %909 = vmatpush.msra.mxu0 %v888
    %910 = vmatpush.msra.mxu0 %v887
    %911 = vmatpush.msra.mxu0 %v886
    %912 = vmatpush.msra.mxu0 %v885
    %913 = vmatpush.msra.mxu0 %v884
    %914 = vmatpush.msra.mxu0 %v883
    %915 = vmatmul.f32.gmra.mxu0 %v802
    %v916 = vpop.f32.mrf.mxu0
    %v917 = vadd.f32 0.0, %v916
    %918 = vmatmul.f32.gmra.mxu0 %v803
    %v919 = vpop.f32.mrf.mxu0
    %v920 = vadd.f32 0.0, %v919
    %921 = vmatmul.f32.gmra.mxu0 %v804
    %v922 = vpop.f32.mrf.mxu0
    %v923 = vadd.f32 0.0, %v922
    %924 = vmatmul.f32.gmra.mxu0 %v805
    %v925 = vpop.f32.mrf.mxu0
    %v926 = vadd.f32 0.0, %v925
    %927 = vdwg.mxu0
    %928 = vmatpush.msra.mxu0 %v881
    %929 = vmatpush.msra.mxu0 %v880
    %930 = vmatpush.msra.mxu0 %v879
    %931 = vmatpush.msra.mxu0 %v878
    %932 = vmatpush.msra.mxu0 %v877
    %933 = vmatpush.msra.mxu0 %v876
    %934 = vmatpush.msra.mxu0 %v875
    %935 = vmatpush.msra.mxu0 %v874
    %936 = vmatpush.msra.mxu0 %v873
    %937 = vmatpush.msra.mxu0 %v872
    %938 = vmatpush.msra.mxu0 %v871
    %939 = vmatpush.msra.mxu0 %v870
    %940 = vmatpush.msra.mxu0 %v869
    %941 = vmatpush.msra.mxu0 %v868
    %942 = vmatpush.msra.mxu0 %v867
    %943 = vmatpush.msra.mxu0 %v866
    %944 = vmatmul.f32.gmra.mxu0 %v826
    %v945 = vpop.f32.mrf.mxu0
    %v946 = vadd.f32 %v917, %v945
    %947 = vmatmul.f32.gmra.mxu0 %v829
    %v948 = vpop.f32.mrf.mxu0
    %v949 = vadd.f32 %v920, %v948
    %950 = vmatmul.f32.gmra.mxu0 %v832
    %v951 = vpop.f32.mrf.mxu0
    %v952 = vadd.f32 %v923, %v951
    %953 = vmatmul.f32.gmra.mxu0 %v835
    %v954 = vpop.f32.mrf.mxu0
    %v955 = vadd.f32 %v926, %v954
    %956 = vdwg.mxu0
    %s957 = scalar_lea.vmem [#allocation11], 256
    %v958 = vld [vmem:[%s957] sm:$0xff]
    %v959 = vld [vmem:[%s957 + $0x8] sm:$0xff]
    %v960 = vld [vmem:[%s957 + $0x10] sm:$0xff]
    %v961 = vld [vmem:[%s957 + $0x18] sm:$0xff]
    %v962 = vld [vmem:[%s957 + $0x20] sm:$0xff]
    %v963 = vld [vmem:[%s957 + $0x28] sm:$0xff]
    %v964 = vld [vmem:[%s957 + $0x30] sm:$0xff]
    %v965 = vld [vmem:[%s957 + $0x38] sm:$0xff]
    %v966 = vld [vmem:[%s957 + $0x40] sm:$0xff]
    %v967 = vld [vmem:[%s957 + $0x48] sm:$0xff]
    %v968 = vld [vmem:[%s957 + $0x50] sm:$0xff]
    %v969 = vld [vmem:[%s957 + $0x58] sm:$0xff]
    %v970 = vld [vmem:[%s957 + $0x60] sm:$0xff]
    %v971 = vld [vmem:[%s957 + $0x68] sm:$0xff]
    %v972 = vld [vmem:[%s957 + $0x70] sm:$0xff]
    %v973 = vld [vmem:[%s957 + $0x78] sm:$0xff]
    %974 = vmatpush.msra.mxu0 %v973
    %975 = vmatpush.msra.mxu0 %v972
    %976 = vmatpush.msra.mxu0 %v971
    %977 = vmatpush.msra.mxu0 %v970
    %978 = vmatpush.msra.mxu0 %v969
    %979 = vmatpush.msra.mxu0 %v968
    %980 = vmatpush.msra.mxu0 %v967
    %981 = vmatpush.msra.mxu0 %v966
    %982 = vmatpush.msra.mxu0 %v965
    %983 = vmatpush.msra.mxu0 %v964
    %984 = vmatpush.msra.mxu0 %v963
    %985 = vmatpush.msra.mxu0 %v962
    %986 = vmatpush.msra.mxu0 %v961
    %987 = vmatpush.msra.mxu0 %v960
    %988 = vmatpush.msra.mxu0 %v959
    %989 = vmatpush.msra.mxu0 %v958
    %990 = vmatmul.f32.gmra.mxu0 %v855
    %v991 = vpop.f32.mrf.mxu0
    %v992 = vadd.f32 0.0, %v991
    %993 = vmatmul.f32.gmra.mxu0 %v858
    %v994 = vpop.f32.mrf.mxu0
    %v995 = vadd.f32 0.0, %v994
    %996 = vmatmul.f32.gmra.mxu0 %v861
    %v997 = vpop.f32.mrf.mxu0
    %v998 = vadd.f32 0.0, %v997
    %999 = vmatmul.f32.gmra.mxu0 %v864
    %v1000 = vpop.f32.mrf.mxu0
    %v1001 = vadd.f32 0.0, %v1000
    %1002 = vdwg.mxu0
    %v1003 = vadd.f32 %v946, %v992
    %v1004 = vadd.f32 %v949, %v995
    %v1005 = vadd.f32 %v952, %v998
    %v1006 = vadd.f32 %v955, %v1001
    %v1007 = vadd.f32 %v1003, %v1004
    %v1008 = vadd.f32 %v1007, %v1005
    %v1009 = vadd.f32 %v1008, %v1006
    %v1010 = vrot.slane %v1009, 4
    %v1011 = vadd.f32 %v1009, %v1010
    %v1012 = vrot.slane %v1011, 2
    %v1013 = vadd.f32 %v1011, %v1012
    %v1014 = vrot.slane %v1013, 1
    %v1015 = vadd.f32 %v1013, %v1014
    %v1016 = vmul.f32 %v1003, %v1003
    %v1017 = vmul.f32 %v1004, %v1004
    %v1018 = vmul.f32 %v1005, %v1005
    %v1019 = vmul.f32 %v1006, %v1006
    %v1020 = vadd.f32 %v1016, %v1017
    %v1021 = vadd.f32 %v1020, %v1018
    %v1022 = vadd.f32 %v1021, %v1019
    %v1023 = vrot.slane %v1022, 4
    %v1024 = vadd.f32 %v1022, %v1023
    %v1025 = vrot.slane %v1024, 2
    %v1026 = vadd.f32 %v1024, %v1025
    %v1027 = vrot.slane %v1026, 1
    %v1028 = vadd.f32 %v1026, %v1027
    %1029 = vmatpush.msra.mxu0 %v168
    %1030 = vmatpush.msra.mxu0 %v167
    %1031 = vmatpush.msra.mxu0 %v166
    %1032 = vmatpush.msra.mxu0 %v165
    %1033 = vmatpush.msra.mxu0 %v164
    %1034 = vmatpush.msra.mxu0 %v163
    %1035 = vmatpush.msra.mxu0 %v162
    %1036 = vmatpush.msra.mxu0 %v161
    %1037 = vmatpush.msra.mxu0 %v160
    %1038 = vmatpush.msra.mxu0 %v159
    %1039 = vmatpush.msra.mxu0 %v158
    %1040 = vmatpush.msra.mxu0 %v157
    %1041 = vmatpush.msra.mxu0 %v156
    %1042 = vmatpush.msra.mxu0 %v155
    %1043 = vmatpush.msra.mxu0 %v154
    %1044 = vmatpush.msra.mxu0 %v153
    %1045 = vmatmul.f32.gmra.mxu0 %v1015
    %v1046 = vpop.f32.mrf.mxu0
    %v1047 = vadd.f32 0.0, %v1046
    %1048 = vdwg.mxu0
    %1049 = vmatpush.msra.mxu0 %v168
    %1050 = vmatpush.msra.mxu0 %v167
    %1051 = vmatpush.msra.mxu0 %v166
    %1052 = vmatpush.msra.mxu0 %v165
    %1053 = vmatpush.msra.mxu0 %v164
    %1054 = vmatpush.msra.mxu0 %v163
    %1055 = vmatpush.msra.mxu0 %v162
    %1056 = vmatpush.msra.mxu0 %v161
    %1057 = vmatpush.msra.mxu0 %v160
    %1058 = vmatpush.msra.mxu0 %v159
    %1059 = vmatpush.msra.mxu0 %v158
    %1060 = vmatpush.msra.mxu0 %v157
    %1061 = vmatpush.msra.mxu0 %v156
    %1062 = vmatpush.msra.mxu0 %v155
    %1063 = vmatpush.msra.mxu0 %v154
    %1064 = vmatpush.msra.mxu0 %v153
    %1065 = vmatmul.f32.gmra.mxu0 %v1028
    %v1066 = vpop.f32.mrf.mxu0
    %v1067 = vadd.f32 0.0, %v1066
    %1068 = vdwg.mxu0
    %v1069 = vmul.f32 %v1047, %v1047
    %v1070 = vsub.f32 %v1067, %v1069
    %v1071 = vperm.slane %v1047, 0
    %v1072 = vsub.f32 %v1003, %v1071
    %v1073 = vsub.f32 %v1004, %v1071
    %v1074 = vsub.f32 %v1005, %v1071
    %v1075 = vsub.f32 %v1006, %v1071
    %v1076 = vadd.f32 %v1070, 1e-05
    %v1077 = vrsqrt.pop %v1076
    %v1078 = vmul.f32 %v1077, %v1076
    %v1079 = vmul.f32 %v1078, %v1077
    %v1080 = vmul.f32 0.5, %v1079
    %v1081 = vsub.f32 1.5, %v1080
    %v1082 = vmul.f32 %v1077, %v1081
    %vm1083 = vweird.f32 %v1076
    %vm1084 = vweird.f32 %v1077
    %vm1085 = vmor %vm1083, %vm1084
    %v1086 = vsel %vm1085, %v1077, %v1082
    %v1087 = vperm.slane %v1086, 0
    %v1088 = vmul.f32 %v1072, %v1087
    %v1089 = vmul.f32 %v1073, %v1087
    %v1090 = vmul.f32 %v1074, %v1087
    %v1091 = vmul.f32 %v1075, %v1087
    %v1093 = vperm.slane %v806, 0
    %v1095 = vmul.f32 %v1088, %v1093
    %v1096 = vmul.f32 %v1089, %v1093
    %v1097 = vmul.f32 %v1090, %v1093
    %v1098 = vmul.f32 %v1091, %v1093
    %v1100 = vperm.slane %v807, 0
    %v1102 = vadd.f32 %v1095, %v1100
    %v1103 = vadd.f32 %v1096, %v1100
    %v1104 = vadd.f32 %v1097, %v1100
    %v1105 = vadd.f32 %v1098, %v1100
    %v1106 = vmax.f32 %v1102, 0.0
    %v1107 = vmax.f32 %v1103, 0.0
    %v1108 = vmax.f32 %v1104, 0.0
    %v1109 = vmax.f32 %v1105, 0.0
    %v1110 = vld [vmem:[%s13] sm:$0x3]
    %v1112 = vsel %vm175, %v1110, 0
    %1114 = vmatpush.msra.mxu0 0.0
    %1115 = vmatpush.msra.mxu0 0.0
    %1116 = vmatpush.msra.mxu0 0.0
    %1117 = vmatpush.msra.mxu0 0.0
    %1118 = vmatpush.msra.mxu0 0.0
    %1119 = vmatpush.msra.mxu0 0.0
    %1120 = vmatpush.msra.mxu0 0.0
    %1121 = vmatpush.msra.mxu0 0.0
    %1122 = vmatpush.msra.mxu0 0.0
    %1123 = vmatpush.msra.mxu0 0.0
    %1124 = vmatpush.msra.mxu0 0.0
    %1125 = vmatpush.msra.mxu0 0.0
    %1126 = vmatpush.msra.mxu0 %v1109
    %1127 = vmatpush.msra.mxu0 %v1108
    %1128 = vmatpush.msra.mxu0 %v1107
    %1129 = vmatpush.msra.mxu0 %v1106
    %1130 = vmatmul.f32.gmra.mxu0 %v1112
    %v1131 = vpop.f32.mrf.mxu0
    %v1132 = vadd.f32 0.0, %v1131
    %1133 = vdwg.mxu0
    %v1134 = vld [vmem:[%s14] sm:$0xff]
    %v1135 = vld [vmem:[%s14 + $0x8] sm:$0xff]
    %v1136 = vld [vmem:[%s14 + $0x10] sm:$0xff]
    %v1137 = vld [vmem:[%s14 + $0x18] sm:$0xff]
    %v1138 = vld [vmem:[%s14 + $0x20] sm:$0xff]
    %v1139 = vld [vmem:[%s14 + $0x28] sm:$0xff]
    %v1140 = vld [vmem:[%s14 + $0x30] sm:$0xff]
    %v1141 = vld [vmem:[%s14 + $0x38] sm:$0xff]
    %v1142 = vld [vmem:[%s14 + $0x40] sm:$0xff]
    %v1143 = vld [vmem:[%s14 + $0x48] sm:$0xff]
    %v1144 = vld [vmem:[%s14 + $0x50] sm:$0xff]
    %v1145 = vld [vmem:[%s14 + $0x58] sm:$0xff]
    %v1146 = vld [vmem:[%s14 + $0x60] sm:$0xff]
    %v1147 = vld [vmem:[%s14 + $0x68] sm:$0xff]
    %v1148 = vld [vmem:[%s14 + $0x70] sm:$0xff]
    %v1149 = vld [vmem:[%s14 + $0x78] sm:$0xff]
    %1150 = vmatpush.msra.mxu0 %v1149
    %1151 = vmatpush.msra.mxu0 %v1148
    %1152 = vmatpush.msra.mxu0 %v1147
    %1153 = vmatpush.msra.mxu0 %v1146
    %1154 = vmatpush.msra.mxu0 %v1145
    %1155 = vmatpush.msra.mxu0 %v1144
    %1156 = vmatpush.msra.mxu0 %v1143
    %1157 = vmatpush.msra.mxu0 %v1142
    %1158 = vmatpush.msra.mxu0 %v1141
    %1159 = vmatpush.msra.mxu0 %v1140
    %1160 = vmatpush.msra.mxu0 %v1139
    %1161 = vmatpush.msra.mxu0 %v1138
    %1162 = vmatpush.msra.mxu0 %v1137
    %1163 = vmatpush.msra.mxu0 %v1136
    %1164 = vmatpush.msra.mxu0 %v1135
    %1165 = vmatpush.msra.mxu0 %v1134
    %1166 = vmatmul.f32.gmra.mxu0 %v1132
    %v1167 = vpop.f32.mrf.mxu0
    %v1168 = vadd.f32 0.0, %v1167
    %1169 = vdwg.mxu0
    %vm1170 = vcmask 58368
    %1171 = vst.msk [vmem:[#allocation13] sm:$0x3] %vm1170, %v1168
    // Predicated region
    $region86: #{tpu_custom_call.1} parent=1 // pred_check
      _
    $region87: #{tpu_custom_call.1} parent=1 // pred_check_branch
      %1173 = sbr.rel (0) target = $region89
    $region88: #{tpu_custom_call.1} parent=1 // pred_region
      %1175 = vsyncadd [#allocation4], 0
      %s1177 = sshll.u32 [#allocation13], 4
      %s1178 = int_to_ptr.vmem [resolvable:$true] %s1177
      %s1179 = sshll.u32 %s15, 4
      %s1180 = int_to_ptr.hbm [resolvable:$true] %s1179
      %1182 = dma.vmem_to_hbm [thread:$0]  %s1178, 32, %s1180, [#allocation4]
    $region89: #{tpu_custom_call.1} parent=1 // pred_fallthru
      _
    // Predicated region
    $region90: #{tpu_custom_call.1} parent=1 // pred_check
      _
    $region91: #{tpu_custom_call.1} parent=1 // pred_check_branch
      %1184 = sbr.rel (0) target = $region93
    $region92: #{tpu_custom_call.1} parent=1 // pred_region
      %1186 = dma.done [#allocation4], 32
    $region93: #{tpu_custom_call.1} parent=1 // pred_fallthru
      _
    %1187 = vsyncpa [#allocation3], 1
    %1188 = vsyncpa [#allocation6], 1
    %1189 = vsyncpa [#allocation9], 1
    %1190 = vsyncpa [#allocation12], 1
    %1191 = vsyncpa [#allocation4], 1

</llo_original>
